<compile_context>
chip_gen: v7x
topology: tpu7x:2x2x1
jax: 0.10.0
libtpu: 0.0.40
codegen_flags: <defaults>
</compile_context>

<pallas_src>
import functools

import jax
import jax.numpy as jnp
from jax.experimental import pallas as pl
from jax.experimental.pallas import tpu as pltpu


# ---------------------------------------------------------------------------
# Fused kernel: conv1x1 (MXU) -> per-joint softmax -> soft-argmax coords.
# Single grid step; the (small, static) batch is unrolled inside the kernel.
# ---------------------------------------------------------------------------
def metric_scale_forward(x_nchw, w2, b2, wmap_x, wmap_y, wmap_z,
                         *, num_pred, depth):
    B, Cin, H, W = x_nchw.shape
    HW = H * W

    # Contiguous trailing-dim collapse -> free (bitcast) reshape in XLA; gives
    # the kernel a lane dimension of HW instead of W.
    x3 = x_nchw.reshape(B, Cin, HW)

    def kernel(x_ref, w_ref, b_ref, wx_ref, wy_ref, wz_ref, o_ref):
        wmat = w_ref[...]                         # (Cout, Cin) f32
        bvec = b_ref[...]                         # (Cout, 1)   f32
        wx = wx_ref[...]                          # (N, depth, HW)
        wy = wy_ref[...]
        wz = wz_ref[...]

        for b in range(B):                        # static unroll (B is tiny)
            # --- 1x1 conv for this batch: (Cout, Cin) @ (Cin, HW) on the MXU --
            jp = jnp.dot(wmat, x_ref[b],
                         preferred_element_type=jnp.float32) + bvec  # (Cout, HW)

            # --- relabel to (num_pred, depth, HW): sublane split only (free) --
            jp3 = jp.reshape(num_pred, depth, HW)

            # --- numerically stable per-joint softmax statistics --------------
            mx = jnp.max(jnp.max(jp3, axis=2), axis=1, keepdims=True)   # (N, 1)
            e = jnp.exp(jp3 - mx.reshape(num_pred, 1, 1))               # (N,D,HW)

            # --- soft-argmax: weighted sums, exact divide of 3 scalars/joint --
            denom = jnp.sum(jnp.sum(e, axis=2), axis=1, keepdims=True)        # (N,1)
            sx = jnp.sum(jnp.sum(e * wx, axis=2), axis=1, keepdims=True)
            sy = jnp.sum(jnp.sum(e * wy, axis=2), axis=1, keepdims=True)
            sz = jnp.sum(jnp.sum(e * wz, axis=2), axis=1, keepdims=True)
            coords = jnp.concatenate([sx, sy, sz], axis=1) / denom            # (N,3)
            o_ref[b] = coords.astype(o_ref.dtype)

    vmem = pl.BlockSpec(memory_space=pltpu.MemorySpace.VMEM)
    return pl.pallas_call(
        kernel,
        out_shape=jax.ShapeDtypeStruct((B, num_pred, 3), jnp.float32),
        in_specs=[vmem] * 6,
        out_specs=vmem,
    )(x3, w2, b2, wmap_x, wmap_y, wmap_z)


# ---------------------------------------------------------------------------
# Module wrapper (parameters initialized deterministically in-script).
# ---------------------------------------------------------------------------
class MetricScaleLayerPallas:
    IN_CH = 2048

    def __init__(self, numPred, imgSize=256, depth=8, striding=32,
                 SC_W=2.2, SC_H=2.2, SC_D=2.2, key=None):
        self.depth = depth
        self.numPred = numPred
        self.outputCHNum = numPred * depth
        self.W = imgSize // striding
        self.H = imgSize // striding
        self.D = depth

        k1, k2 = jax.random.split(key)
        bound = 1.0 / (self.IN_CH ** 0.5)
        self.weight = jax.random.uniform(
            k1, (self.outputCHNum, self.IN_CH, 1, 1), jnp.float32, -bound, bound)
        self.bias = jax.random.uniform(
            k2, (self.outputCHNum,), jnp.float32, -bound, bound)

        self.idx_w = jnp.linspace(0.0, 1.0, self.W) * ((self.W - 1) / self.W) * SC_W
        self.idx_h = jnp.linspace(0.0, 1.0, self.H) * ((self.H - 1) / self.H) * SC_H
        self.idx_d = jnp.linspace(0.0, 1.0, self.D) * ((self.D - 1) / self.D) * SC_D

        # ---- kernel-ready parameters (natural channel order, all f32) --------
        self.w2 = self.weight.reshape(self.outputCHNum, self.IN_CH)
        self.b2 = self.bias.reshape(self.outputCHNum, 1)

        # Per-voxel coordinate maps in the kernel's natural (depth, HW) conv
        # layout, from torch's row-major .view(B, C//depth, H, W, depth):
        #   flat index within one joint:  f  = c_local*H*W + h*W + w
        #   view coords:                  h' = f // (W*D)
        #                                 w' = (f // D) % W
        #                                 d' = f % D
        HW = self.H * self.W
        c_local = jnp.arange(self.depth)[:, None]          # (depth, 1)
        hw = jnp.arange(HW)[None, :]                        # (1, HW)
        f = c_local * HW + hw                                # (depth, HW)
        h_v = f // (self.W * self.D)
        w_v = (f // self.D) % self.W
        d_v = f % self.D
        tile = lambda m: jnp.tile(m[None].astype(jnp.float32), (numPred, 1, 1))
        self.wmap_x = tile(self.idx_w[w_v])                 # (numPred, depth, HW)
        self.wmap_y = tile(self.idx_h[h_v])
        self.wmap_z = tile(self.idx_d[d_v])

        self._fwd = jax.jit(functools.partial(
            metric_scale_forward, num_pred=self.numPred, depth=self.depth))

    def __call__(self, x):
        # x: (B, 2048, H, W) NCHW float32
        return self._fwd(x, self.w2, self.b2,
                         self.wmap_x, self.wmap_y, self.wmap_z)


# ---------------------------------------------------------------------------
# Pure-JAX f32 reference (mirrors the PyTorch forward exactly) for verification.
# ---------------------------------------------------------------------------
def reference_forward(layer, x):
    w = layer.weight.reshape(layer.outputCHNum, layer.IN_CH)
    jp = jnp.einsum("bchw,oc->bohw", x, w, precision="highest") \
        + layer.bias[None, :, None, None]
    B, C, H, W = jp.shape
    vox = jp.reshape(B, C // layer.depth, H, W, layer.depth)
    mx = jnp.max(vox.reshape(B, vox.shape[1], -1), axis=-1)[:, :, None, None, None]
    e = jnp.exp(vox - mx)
    sm = e / jnp.sum(e, axis=(2, 3, 4), keepdims=True)
    cx = jnp.einsum("bnhwd,w->bn", sm, layer.idx_w, precision="highest")
    cy = jnp.einsum("bnhwd,h->bn", sm, layer.idx_h, precision="highest")
    cz = jnp.einsum("bnhwd,d->bn", sm, layer.idx_d, precision="highest")
    return jnp.stack([cx, cy, cz], axis=2)


if __name__ == "__main__":
    key = jax.random.PRNGKey(0)
    k_param, k_x = jax.random.split(key)

    numPred = 4
    imgSize, striding, depth = 256, 32, 8        # -> H = W = 8, D = 8
    B = 2

    layer = MetricScaleLayerPallas(numPred, imgSize=imgSize, depth=depth,
                                   striding=striding, key=k_param)

    x = jax.random.normal(k_x, (B, layer.IN_CH, imgSize // striding,
                                imgSize // striding), dtype=jnp.float32)

    coords = jax.block_until_ready(layer(x))

    ref = reference_forward(layer, x)
    assert coords.shape == (B, numPred, 3), coords.shape
    assert jnp.allclose(coords, ref, rtol=1e-2, atol=1e-2), (
        f"max abs err {jnp.max(jnp.abs(coords - ref))}")

    print("KERNEL_OK")
</pallas_src>

<mosaic_0001>
module attributes {stable_mosaic.version = 11 : i64} {
  func.func @kernel(%arg0: memref<2x2048x64xf32, #tpu.memory_space<vmem>>, %arg1: memref<32x2048xf32, #tpu.memory_space<vmem>>, %arg2: memref<32x1xf32, #tpu.memory_space<vmem>>, %arg3: memref<4x8x64xf32, #tpu.memory_space<vmem>>, %arg4: memref<4x8x64xf32, #tpu.memory_space<vmem>>, %arg5: memref<4x8x64xf32, #tpu.memory_space<vmem>>, %arg6: memref<2x4x3xf32, #tpu.memory_space<vmem>>) attributes {dimension_semantics = [], scalar_prefetch = 0 : i64, scratch_operands = 0 : i64, tpu.core_type = #tpu.core_type<tc>} {
    %c0 = arith.constant 0 : index
    %c0_0 = arith.constant 0 : index
    %0 = vector.load %arg1[%c0, %c0_0] : memref<32x2048xf32, #tpu.memory_space<vmem>>, vector<32x2048xf32>
    %c0_1 = arith.constant 0 : index
    %c0_2 = arith.constant 0 : index
    %1 = vector.load %arg2[%c0_1, %c0_2] : memref<32x1xf32, #tpu.memory_space<vmem>>, vector<32x1xf32>
    %c0_3 = arith.constant 0 : index
    %c0_4 = arith.constant 0 : index
    %c0_5 = arith.constant 0 : index
    %2 = vector.load %arg3[%c0_3, %c0_4, %c0_5] : memref<4x8x64xf32, #tpu.memory_space<vmem>>, vector<4x8x64xf32>
    %c0_6 = arith.constant 0 : index
    %c0_7 = arith.constant 0 : index
    %c0_8 = arith.constant 0 : index
    %3 = vector.load %arg4[%c0_6, %c0_7, %c0_8] : memref<4x8x64xf32, #tpu.memory_space<vmem>>, vector<4x8x64xf32>
    %c0_9 = arith.constant 0 : index
    %c0_10 = arith.constant 0 : index
    %c0_11 = arith.constant 0 : index
    %4 = vector.load %arg5[%c0_9, %c0_10, %c0_11] : memref<4x8x64xf32, #tpu.memory_space<vmem>>, vector<4x8x64xf32>
    %c0_12 = arith.constant 0 : index
    %c0_13 = arith.constant 0 : index
    %c0_14 = arith.constant 0 : index
    %5 = vector.load %arg0[%c0_12, %c0_13, %c0_14] : memref<2x2048x64xf32, #tpu.memory_space<vmem>>, vector<1x2048x64xf32>
    %6 = vector.shape_cast %5 : vector<1x2048x64xf32> to vector<2048x64xf32>
    %cst = arith.constant dense<0.000000e+00> : vector<32x64xf32>
    %7 = tpu.matmul %0, %6, %cst {dimension_numbers = #tpu.dot_dimension_numbers<[1], [0], [0], [1], [0, 0, 1, 1], [], []>} : vector<32x2048xf32>, vector<2048x64xf32>, vector<32x64xf32> -> vector<32x64xf32>
    %8 = vector.broadcast %1 : vector<32x1xf32> to vector<32x64xf32>
    %9 = arith.addf %7, %8 : vector<32x64xf32>
    %10 = vector.shape_cast %9 : vector<32x64xf32> to vector<4x8x64xf32>
    %cst_15 = arith.constant dense<0xFF800000> : vector<4x8xf32>
    %11 = vector.multi_reduction <maximumf>, %10, %cst_15 [2] : vector<4x8x64xf32> to vector<4x8xf32>
    %cst_16 = arith.constant dense<0xFF800000> : vector<4xf32>
    %12 = vector.multi_reduction <maximumf>, %11, %cst_16 [1] : vector<4x8xf32> to vector<4xf32>
    %13 = vector.shape_cast %12 : vector<4xf32> to vector<4x1xf32>
    %14 = vector.shape_cast %13 : vector<4x1xf32> to vector<4x1x1xf32>
    %15 = vector.broadcast %14 : vector<4x1x1xf32> to vector<4x8x64xf32>
    %16 = arith.subf %10, %15 : vector<4x8x64xf32>
    %17 = math.exp %16 : vector<4x8x64xf32>
    %cst_17 = arith.constant dense<0.000000e+00> : vector<4x8xf32>
    %18 = vector.multi_reduction <add>, %17, %cst_17 [2] : vector<4x8x64xf32> to vector<4x8xf32>
    %cst_18 = arith.constant dense<0.000000e+00> : vector<4xf32>
    %19 = vector.multi_reduction <add>, %18, %cst_18 [1] : vector<4x8xf32> to vector<4xf32>
    %20 = vector.shape_cast %19 : vector<4xf32> to vector<4x1xf32>
    %21 = arith.mulf %17, %2 : vector<4x8x64xf32>
    %cst_19 = arith.constant dense<0.000000e+00> : vector<4x8xf32>
    %22 = vector.multi_reduction <add>, %21, %cst_19 [2] : vector<4x8x64xf32> to vector<4x8xf32>
    %cst_20 = arith.constant dense<0.000000e+00> : vector<4xf32>
    %23 = vector.multi_reduction <add>, %22, %cst_20 [1] : vector<4x8xf32> to vector<4xf32>
    %24 = vector.shape_cast %23 : vector<4xf32> to vector<4x1xf32>
    %25 = arith.mulf %17, %3 : vector<4x8x64xf32>
    %cst_21 = arith.constant dense<0.000000e+00> : vector<4x8xf32>
    %26 = vector.multi_reduction <add>, %25, %cst_21 [2] : vector<4x8x64xf32> to vector<4x8xf32>
    %cst_22 = arith.constant dense<0.000000e+00> : vector<4xf32>
    %27 = vector.multi_reduction <add>, %26, %cst_22 [1] : vector<4x8xf32> to vector<4xf32>
    %28 = vector.shape_cast %27 : vector<4xf32> to vector<4x1xf32>
    %29 = arith.mulf %17, %4 : vector<4x8x64xf32>
    %cst_23 = arith.constant dense<0.000000e+00> : vector<4x8xf32>
    %30 = vector.multi_reduction <add>, %29, %cst_23 [2] : vector<4x8x64xf32> to vector<4x8xf32>
    %cst_24 = arith.constant dense<0.000000e+00> : vector<4xf32>
    %31 = vector.multi_reduction <add>, %30, %cst_24 [1] : vector<4x8xf32> to vector<4xf32>
    %32 = vector.shape_cast %31 : vector<4xf32> to vector<4x1xf32>
    %33 = tpu.concatenate %24, %28, %32 in 1 : vector<4x1xf32>, vector<4x1xf32>, vector<4x1xf32> -> vector<4x3xf32>
    %34 = vector.broadcast %20 : vector<4x1xf32> to vector<4x3xf32>
    %35 = arith.divf %33, %34 : vector<4x3xf32>
    %c0_25 = arith.constant 0 : index
    %c0_26 = arith.constant 0 : index
    %c0_27 = arith.constant 0 : index
    %36 = vector.load %arg6[%c0_25, %c0_26, %c0_27] : memref<2x4x3xf32, #tpu.memory_space<vmem>>, vector<1x4x3xf32>
    %37 = vector.shape_cast %36 : vector<1x4x3xf32> to vector<4x3xf32>
    %38 = vector.shape_cast %35 : vector<4x3xf32> to vector<1x4x3xf32>
    tpu.vector_store %arg6[%c0_25, %c0_26, %c0_27], %38 {strides = array<i32>} : memref<2x4x3xf32, #tpu.memory_space<vmem>>, vector<1x4x3xf32>,
    %c1 = arith.constant 1 : index
    %c0_28 = arith.constant 0 : index
    %c0_29 = arith.constant 0 : index
    %39 = vector.load %arg0[%c1, %c0_28, %c0_29] : memref<2x2048x64xf32, #tpu.memory_space<vmem>>, vector<1x2048x64xf32>
    %40 = vector.shape_cast %39 : vector<1x2048x64xf32> to vector<2048x64xf32>
    %cst_30 = arith.constant dense<0.000000e+00> : vector<32x64xf32>
    %41 = tpu.matmul %0, %40, %cst_30 {dimension_numbers = #tpu.dot_dimension_numbers<[1], [0], [0], [1], [0, 0, 1, 1], [], []>} : vector<32x2048xf32>, vector<2048x64xf32>, vector<32x64xf32> -> vector<32x64xf32>
    %42 = vector.broadcast %1 : vector<32x1xf32> to vector<32x64xf32>
    %43 = arith.addf %41, %42 : vector<32x64xf32>
    %44 = vector.shape_cast %43 : vector<32x64xf32> to vector<4x8x64xf32>
    %cst_31 = arith.constant dense<0xFF800000> : vector<4x8xf32>
    %45 = vector.multi_reduction <maximumf>, %44, %cst_31 [2] : vector<4x8x64xf32> to vector<4x8xf32>
    %cst_32 = arith.constant dense<0xFF800000> : vector<4xf32>
    %46 = vector.multi_reduction <maximumf>, %45, %cst_32 [1] : vector<4x8xf32> to vector<4xf32>
    %47 = vector.shape_cast %46 : vector<4xf32> to vector<4x1xf32>
    %48 = vector.shape_cast %47 : vector<4x1xf32> to vector<4x1x1xf32>
    %49 = vector.broadcast %48 : vector<4x1x1xf32> to vector<4x8x64xf32>
    %50 = arith.subf %44, %49 : vector<4x8x64xf32>
    %51 = math.exp %50 : vector<4x8x64xf32>
    %cst_33 = arith.constant dense<0.000000e+00> : vector<4x8xf32>
    %52 = vector.multi_reduction <add>, %51, %cst_33 [2] : vector<4x8x64xf32> to vector<4x8xf32>
    %cst_34 = arith.constant dense<0.000000e+00> : vector<4xf32>
    %53 = vector.multi_reduction <add>, %52, %cst_34 [1] : vector<4x8xf32> to vector<4xf32>
    %54 = vector.shape_cast %53 : vector<4xf32> to vector<4x1xf32>
    %55 = arith.mulf %51, %2 : vector<4x8x64xf32>
    %cst_35 = arith.constant dense<0.000000e+00> : vector<4x8xf32>
    %56 = vector.multi_reduction <add>, %55, %cst_35 [2] : vector<4x8x64xf32> to vector<4x8xf32>
    %cst_36 = arith.constant dense<0.000000e+00> : vector<4xf32>
    %57 = vector.multi_reduction <add>, %56, %cst_36 [1] : vector<4x8xf32> to vector<4xf32>
    %58 = vector.shape_cast %57 : vector<4xf32> to vector<4x1xf32>
    %59 = arith.mulf %51, %3 : vector<4x8x64xf32>
    %cst_37 = arith.constant dense<0.000000e+00> : vector<4x8xf32>
    %60 = vector.multi_reduction <add>, %59, %cst_37 [2] : vector<4x8x64xf32> to vector<4x8xf32>
    %cst_38 = arith.constant dense<0.000000e+00> : vector<4xf32>
    %61 = vector.multi_reduction <add>, %60, %cst_38 [1] : vector<4x8xf32> to vector<4xf32>
    %62 = vector.shape_cast %61 : vector<4xf32> to vector<4x1xf32>
    %63 = arith.mulf %51, %4 : vector<4x8x64xf32>
    %cst_39 = arith.constant dense<0.000000e+00> : vector<4x8xf32>
    %64 = vector.multi_reduction <add>, %63, %cst_39 [2] : vector<4x8x64xf32> to vector<4x8xf32>
    %cst_40 = arith.constant dense<0.000000e+00> : vector<4xf32>
    %65 = vector.multi_reduction <add>, %64, %cst_40 [1] : vector<4x8xf32> to vector<4xf32>
    %66 = vector.shape_cast %65 : vector<4xf32> to vector<4x1xf32>
    %67 = tpu.concatenate %58, %62, %66 in 1 : vector<4x1xf32>, vector<4x1xf32>, vector<4x1xf32> -> vector<4x3xf32>
    %68 = vector.broadcast %54 : vector<4x1xf32> to vector<4x3xf32>
    %69 = arith.divf %67, %68 : vector<4x3xf32>
    %c1_41 = arith.constant 1 : index
    %c0_42 = arith.constant 0 : index
    %c0_43 = arith.constant 0 : index
    %70 = vector.load %arg6[%c1_41, %c0_42, %c0_43] : memref<2x4x3xf32, #tpu.memory_space<vmem>>, vector<1x4x3xf32>
    %71 = vector.shape_cast %70 : vector<1x4x3xf32> to vector<4x3xf32>
    %72 = vector.shape_cast %69 : vector<4x3xf32> to vector<1x4x3xf32>
    tpu.vector_store %arg6[%c1_41, %c0_42, %c0_43], %72 {strides = array<i32>} : memref<2x4x3xf32, #tpu.memory_space<vmem>>, vector<1x4x3xf32>,
    return
  }
}

</mosaic_0001>

<llo_original>
// kernel: metric_scale_forward.1
$region0: #{metric_scale_forward.1}
  #allocation0 [shape = 'u32[]', space=smem, size = 0x4, offset = 0x4, fixed_abs, tag = 'smem constant byte address 0x4 - core index']
  #allocation1 [shape = 'u32[144,128]{1,0:T(1,128)}', space=vmem, size = 0x12000, scoped, tag = 'internal scratch']
  %s0 = inlined_call_operand.vmem [shape: f32[2,2048,64], index: 0, kind: input, shape index: {}]
  %s1 = inlined_call_operand.vmem [shape: f32[32,2048], index: 1, kind: input, shape index: {}]
  %s2 = inlined_call_operand.vmem [shape: f32[32,1], index: 2, kind: input, shape index: {}]
  %s3 = inlined_call_operand.vmem [shape: f32[4,8,64], index: 3, kind: input, shape index: {}]
  %s4 = inlined_call_operand.vmem [shape: f32[4,8,64], index: 4, kind: input, shape index: {}]
  %s5 = inlined_call_operand.vmem [shape: f32[4,8,64], index: 5, kind: input, shape index: {}]
  %s6 = inlined_call_operand.vmem [shape: f32[2,4,3], index: 6, kind: output, shape index: {}]
  %s7 = sld [smem:[#allocation0]]
  $region34: #{metric_scale_forward.1} parent=0
    _
  %s9 = ssub.s32 1, %s7
  %s10 = scalar_select 0, %s9, %s7
  // Predicated region
  $region2: #{metric_scale_forward.1} parent=0 // pred_check
    _
  $region3: #{metric_scale_forward.1} parent=0 // pred_check_branch
    %12 = sbr.rel (0) target = $region5
  $region4: #{metric_scale_forward.1} parent=0 // pred_region
    _
  $region5: #{metric_scale_forward.1} parent=0 // pred_fallthru
    _
  // Predicated region
  $region6: #{metric_scale_forward.1} parent=0 // pred_check
    _
  $region7: #{metric_scale_forward.1} parent=0 // pred_check_branch
    %14 = sbr.rel (0) target = $region9
  $region8: #{metric_scale_forward.1} parent=0 // pred_region
    _
  $region9: #{metric_scale_forward.1} parent=0 // pred_fallthru
    _
  // Predicated region
  $region10: #{metric_scale_forward.1} parent=0 // pred_check
    _
  $region11: #{metric_scale_forward.1} parent=0 // pred_check_branch
    %16 = sbr.rel (0) target = $region13
  $region12: #{metric_scale_forward.1} parent=0 // pred_region
    _
  $region13: #{metric_scale_forward.1} parent=0 // pred_fallthru
    _
  // Predicated region
  $region14: #{metric_scale_forward.1} parent=0 // pred_check
    _
  $region15: #{metric_scale_forward.1} parent=0 // pred_check_branch
    %18 = sbr.rel (0) target = $region17
  $region16: #{metric_scale_forward.1} parent=0 // pred_region
    _
  $region17: #{metric_scale_forward.1} parent=0 // pred_fallthru
    _
  // Predicated region
  $region18: #{metric_scale_forward.1} parent=0 // pred_check
    _
  $region19: #{metric_scale_forward.1} parent=0 // pred_check_branch
    %20 = sbr.rel (0) target = $region21
  $region20: #{metric_scale_forward.1} parent=0 // pred_region
    _
  $region21: #{metric_scale_forward.1} parent=0 // pred_fallthru
    _
  // Predicated region
  $region22: #{metric_scale_forward.1} parent=0 // pred_check
    _
  $region23: #{metric_scale_forward.1} parent=0 // pred_check_branch
    %22 = sbr.rel (0) target = $region25
  $region24: #{metric_scale_forward.1} parent=0 // pred_region
    _
  $region25: #{metric_scale_forward.1} parent=0 // pred_fallthru
    _
  %v23 = vld [vmem:[%s1] sm:$0xff]
  %v24 = vld [vmem:[%s1 + $0x8] sm:$0xff]
  %v25 = vld [vmem:[%s1 + $0x10] sm:$0xff]
  %v26 = vld [vmem:[%s1 + $0x18] sm:$0xff]
  %v27 = vld [vmem:[%s1 + $0x20] sm:$0xff]
  %v28 = vld [vmem:[%s1 + $0x28] sm:$0xff]
  %v29 = vld [vmem:[%s1 + $0x30] sm:$0xff]
  %v30 = vld [vmem:[%s1 + $0x38] sm:$0xff]
  %v31 = vld [vmem:[%s1 + $0x40] sm:$0xff]
  %v32 = vld [vmem:[%s1 + $0x48] sm:$0xff]
  %v33 = vld [vmem:[%s1 + $0x50] sm:$0xff]
  %v34 = vld [vmem:[%s1 + $0x58] sm:$0xff]
  %v35 = vld [vmem:[%s1 + $0x60] sm:$0xff]
  %v36 = vld [vmem:[%s1 + $0x68] sm:$0xff]
  %v37 = vld [vmem:[%s1 + $0x70] sm:$0xff]
  %v38 = vld [vmem:[%s1 + $0x78] sm:$0xff]
  %v39 = vld [vmem:[%s1 + $0x80] sm:$0xff]
  %v40 = vld [vmem:[%s1 + $0x88] sm:$0xff]
  %v41 = vld [vmem:[%s1 + $0x90] sm:$0xff]
  %v42 = vld [vmem:[%s1 + $0x98] sm:$0xff]
  %v43 = vld [vmem:[%s1 + $0xa0] sm:$0xff]
  %v44 = vld [vmem:[%s1 + $0xa8] sm:$0xff]
  %v45 = vld [vmem:[%s1 + $0xb0] sm:$0xff]
  %v46 = vld [vmem:[%s1 + $0xb8] sm:$0xff]
  %v47 = vld [vmem:[%s1 + $0xc0] sm:$0xff]
  %v48 = vld [vmem:[%s1 + $0xc8] sm:$0xff]
  %v49 = vld [vmem:[%s1 + $0xd0] sm:$0xff]
  %v50 = vld [vmem:[%s1 + $0xd8] sm:$0xff]
  %v51 = vld [vmem:[%s1 + $0xe0] sm:$0xff]
  %v52 = vld [vmem:[%s1 + $0xe8] sm:$0xff]
  %v53 = vld [vmem:[%s1 + $0xf0] sm:$0xff]
  %v54 = vld [vmem:[%s1 + $0xf8] sm:$0xff]
  %v55 = vld [vmem:[%s1 + $0x100] sm:$0xff]
  %v56 = vld [vmem:[%s1 + $0x108] sm:$0xff]
  %v57 = vld [vmem:[%s1 + $0x110] sm:$0xff]
  %v58 = vld [vmem:[%s1 + $0x118] sm:$0xff]
  %v59 = vld [vmem:[%s1 + $0x120] sm:$0xff]
  %v60 = vld [vmem:[%s1 + $0x128] sm:$0xff]
  %v61 = vld [vmem:[%s1 + $0x130] sm:$0xff]
  %v62 = vld [vmem:[%s1 + $0x138] sm:$0xff]
  %v63 = vld [vmem:[%s1 + $0x140] sm:$0xff]
  %v64 = vld [vmem:[%s1 + $0x148] sm:$0xff]
  %v65 = vld [vmem:[%s1 + $0x150] sm:$0xff]
  %v66 = vld [vmem:[%s1 + $0x158] sm:$0xff]
  %v67 = vld [vmem:[%s1 + $0x160] sm:$0xff]
  %v68 = vld [vmem:[%s1 + $0x168] sm:$0xff]
  %v69 = vld [vmem:[%s1 + $0x170] sm:$0xff]
  %v70 = vld [vmem:[%s1 + $0x178] sm:$0xff]
  %v71 = vld [vmem:[%s1 + $0x180] sm:$0xff]
  %v72 = vld [vmem:[%s1 + $0x188] sm:$0xff]
  %v73 = vld [vmem:[%s1 + $0x190] sm:$0xff]
  %v74 = vld [vmem:[%s1 + $0x198] sm:$0xff]
  %v75 = vld [vmem:[%s1 + $0x1a0] sm:$0xff]
  %v76 = vld [vmem:[%s1 + $0x1a8] sm:$0xff]
  %v77 = vld [vmem:[%s1 + $0x1b0] sm:$0xff]
  %v78 = vld [vmem:[%s1 + $0x1b8] sm:$0xff]
  %v79 = vld [vmem:[%s1 + $0x1c0] sm:$0xff]
  %v80 = vld [vmem:[%s1 + $0x1c8] sm:$0xff]
  %v81 = vld [vmem:[%s1 + $0x1d0] sm:$0xff]
  %v82 = vld [vmem:[%s1 + $0x1d8] sm:$0xff]
  %v83 = vld [vmem:[%s1 + $0x1e0] sm:$0xff]
  %v84 = vld [vmem:[%s1 + $0x1e8] sm:$0xff]
  %v85 = vld [vmem:[%s1 + $0x1f0] sm:$0xff]
  %v86 = vld [vmem:[%s1 + $0x1f8] sm:$0xff]
  %v87 = vld [vmem:[%s2] sm:$0xff]
  %v88 = vld [vmem:[%s2 + $0x8] sm:$0xff]
  %v89 = vld [vmem:[%s2 + $0x10] sm:$0xff]
  %v90 = vld [vmem:[%s2 + $0x18] sm:$0xff]
  %v91 = vld [vmem:[%s3] sm:$0xff]
  %v92 = vld [vmem:[%s3 + $0x8] sm:$0xff]
  %v93 = vld [vmem:[%s3 + $0x10] sm:$0xff]
  %v94 = vld [vmem:[%s3 + $0x18] sm:$0xff]
  %v95 = vld [vmem:[%s4] sm:$0xff]
  %v96 = vld [vmem:[%s4 + $0x8] sm:$0xff]
  %v97 = vld [vmem:[%s4 + $0x10] sm:$0xff]
  %v98 = vld [vmem:[%s4 + $0x18] sm:$0xff]
  %v99 = vld [vmem:[%s5] sm:$0xff]
  %v100 = vld [vmem:[%s5 + $0x8] sm:$0xff]
  %v101 = vld [vmem:[%s5 + $0x10] sm:$0xff]
  %v102 = vld [vmem:[%s5 + $0x18] sm:$0xff]
  %v103 = vld [vmem:[%s0] sm:$0xff]
  %v104 = vld [vmem:[%s0 + $0x8] sm:$0xff]
  %v105 = vld [vmem:[%s0 + $0x10] sm:$0xff]
  %v106 = vld [vmem:[%s0 + $0x18] sm:$0xff]
  %v107 = vld [vmem:[%s0 + $0x20] sm:$0xff]
  %v108 = vld [vmem:[%s0 + $0x28] sm:$0xff]
  %v109 = vld [vmem:[%s0 + $0x30] sm:$0xff]
  %v110 = vld [vmem:[%s0 + $0x38] sm:$0xff]
  %v111 = vld [vmem:[%s0 + $0x40] sm:$0xff]
  %v112 = vld [vmem:[%s0 + $0x48] sm:$0xff]
  %v113 = vld [vmem:[%s0 + $0x50] sm:$0xff]
  %v114 = vld [vmem:[%s0 + $0x58] sm:$0xff]
  %v115 = vld [vmem:[%s0 + $0x60] sm:$0xff]
  %v116 = vld [vmem:[%s0 + $0x68] sm:$0xff]
  %v117 = vld [vmem:[%s0 + $0x70] sm:$0xff]
  %v118 = vld [vmem:[%s0 + $0x78] sm:$0xff]
  %v119 = vld [vmem:[%s0 + $0x80] sm:$0xff]
  %v120 = vld [vmem:[%s0 + $0x88] sm:$0xff]
  %v121 = vld [vmem:[%s0 + $0x90] sm:$0xff]
  %v122 = vld [vmem:[%s0 + $0x98] sm:$0xff]
  %v123 = vld [vmem:[%s0 + $0xa0] sm:$0xff]
  %v124 = vld [vmem:[%s0 + $0xa8] sm:$0xff]
  %v125 = vld [vmem:[%s0 + $0xb0] sm:$0xff]
  %v126 = vld [vmem:[%s0 + $0xb8] sm:$0xff]
  %v127 = vld [vmem:[%s0 + $0xc0] sm:$0xff]
  %v128 = vld [vmem:[%s0 + $0xc8] sm:$0xff]
  %v129 = vld [vmem:[%s0 + $0xd0] sm:$0xff]
  %v130 = vld [vmem:[%s0 + $0xd8] sm:$0xff]
  %v131 = vld [vmem:[%s0 + $0xe0] sm:$0xff]
  %v132 = vld [vmem:[%s0 + $0xe8] sm:$0xff]
  %v133 = vld [vmem:[%s0 + $0xf0] sm:$0xff]
  %v134 = vld [vmem:[%s0 + $0xf8] sm:$0xff]
  %v135 = vld [vmem:[%s0 + $0x100] sm:$0xff]
  %v136 = vld [vmem:[%s0 + $0x108] sm:$0xff]
  %v137 = vld [vmem:[%s0 + $0x110] sm:$0xff]
  %v138 = vld [vmem:[%s0 + $0x118] sm:$0xff]
  %v139 = vld [vmem:[%s0 + $0x120] sm:$0xff]
  %v140 = vld [vmem:[%s0 + $0x128] sm:$0xff]
  %v141 = vld [vmem:[%s0 + $0x130] sm:$0xff]
  %v142 = vld [vmem:[%s0 + $0x138] sm:$0xff]
  %v143 = vld [vmem:[%s0 + $0x140] sm:$0xff]
  %v144 = vld [vmem:[%s0 + $0x148] sm:$0xff]
  %v145 = vld [vmem:[%s0 + $0x150] sm:$0xff]
  %v146 = vld [vmem:[%s0 + $0x158] sm:$0xff]
  %v147 = vld [vmem:[%s0 + $0x160] sm:$0xff]
  %v148 = vld [vmem:[%s0 + $0x168] sm:$0xff]
  %v149 = vld [vmem:[%s0 + $0x170] sm:$0xff]
  %v150 = vld [vmem:[%s0 + $0x178] sm:$0xff]
  %v151 = vld [vmem:[%s0 + $0x180] sm:$0xff]
  %v152 = vld [vmem:[%s0 + $0x188] sm:$0xff]
  %v153 = vld [vmem:[%s0 + $0x190] sm:$0xff]
  %v154 = vld [vmem:[%s0 + $0x198] sm:$0xff]
  %v155 = vld [vmem:[%s0 + $0x1a0] sm:$0xff]
  %v156 = vld [vmem:[%s0 + $0x1a8] sm:$0xff]
  %v157 = vld [vmem:[%s0 + $0x1b0] sm:$0xff]
  %v158 = vld [vmem:[%s0 + $0x1b8] sm:$0xff]
  %v159 = vld [vmem:[%s0 + $0x1c0] sm:$0xff]
  %v160 = vld [vmem:[%s0 + $0x1c8] sm:$0xff]
  %v161 = vld [vmem:[%s0 + $0x1d0] sm:$0xff]
  %v162 = vld [vmem:[%s0 + $0x1d8] sm:$0xff]
  %v163 = vld [vmem:[%s0 + $0x1e0] sm:$0xff]
  %v164 = vld [vmem:[%s0 + $0x1e8] sm:$0xff]
  %v165 = vld [vmem:[%s0 + $0x1f0] sm:$0xff]
  %v166 = vld [vmem:[%s0 + $0x1f8] sm:$0xff]
  %v167 = vld [vmem:[%s0 + $0x200] sm:$0xff]
  %v168 = vld [vmem:[%s0 + $0x208] sm:$0xff]
  %v169 = vld [vmem:[%s0 + $0x210] sm:$0xff]
  %v170 = vld [vmem:[%s0 + $0x218] sm:$0xff]
  %v171 = vld [vmem:[%s0 + $0x220] sm:$0xff]
  %v172 = vld [vmem:[%s0 + $0x228] sm:$0xff]
  %v173 = vld [vmem:[%s0 + $0x230] sm:$0xff]
  %v174 = vld [vmem:[%s0 + $0x238] sm:$0xff]
  %v175 = vld [vmem:[%s0 + $0x240] sm:$0xff]
  %v176 = vld [vmem:[%s0 + $0x248] sm:$0xff]
  %v177 = vld [vmem:[%s0 + $0x250] sm:$0xff]
  %v178 = vld [vmem:[%s0 + $0x258] sm:$0xff]
  %v179 = vld [vmem:[%s0 + $0x260] sm:$0xff]
  %v180 = vld [vmem:[%s0 + $0x268] sm:$0xff]
  %v181 = vld [vmem:[%s0 + $0x270] sm:$0xff]
  %v182 = vld [vmem:[%s0 + $0x278] sm:$0xff]
  %v183 = vld [vmem:[%s0 + $0x280] sm:$0xff]
  %v184 = vld [vmem:[%s0 + $0x288] sm:$0xff]
  %v185 = vld [vmem:[%s0 + $0x290] sm:$0xff]
  %v186 = vld [vmem:[%s0 + $0x298] sm:$0xff]
  %v187 = vld [vmem:[%s0 + $0x2a0] sm:$0xff]
  %v188 = vld [vmem:[%s0 + $0x2a8] sm:$0xff]
  %v189 = vld [vmem:[%s0 + $0x2b0] sm:$0xff]
  %v190 = vld [vmem:[%s0 + $0x2b8] sm:$0xff]
  %v191 = vld [vmem:[%s0 + $0x2c0] sm:$0xff]
  %v192 = vld [vmem:[%s0 + $0x2c8] sm:$0xff]
  %v193 = vld [vmem:[%s0 + $0x2d0] sm:$0xff]
  %v194 = vld [vmem:[%s0 + $0x2d8] sm:$0xff]
  %v195 = vld [vmem:[%s0 + $0x2e0] sm:$0xff]
  %v196 = vld [vmem:[%s0 + $0x2e8] sm:$0xff]
  %v197 = vld [vmem:[%s0 + $0x2f0] sm:$0xff]
  %v198 = vld [vmem:[%s0 + $0x2f8] sm:$0xff]
  %v199 = vld [vmem:[%s0 + $0x300] sm:$0xff]
  %v200 = vld [vmem:[%s0 + $0x308] sm:$0xff]
  %v201 = vld [vmem:[%s0 + $0x310] sm:$0xff]
  %v202 = vld [vmem:[%s0 + $0x318] sm:$0xff]
  %v203 = vld [vmem:[%s0 + $0x320] sm:$0xff]
  %v204 = vld [vmem:[%s0 + $0x328] sm:$0xff]
  %v205 = vld [vmem:[%s0 + $0x330] sm:$0xff]
  %v206 = vld [vmem:[%s0 + $0x338] sm:$0xff]
  %v207 = vld [vmem:[%s0 + $0x340] sm:$0xff]
  %v208 = vld [vmem:[%s0 + $0x348] sm:$0xff]
  %v209 = vld [vmem:[%s0 + $0x350] sm:$0xff]
  %v210 = vld [vmem:[%s0 + $0x358] sm:$0xff]
  %v211 = vld [vmem:[%s0 + $0x360] sm:$0xff]
  %v212 = vld [vmem:[%s0 + $0x368] sm:$0xff]
  %v213 = vld [vmem:[%s0 + $0x370] sm:$0xff]
  %v214 = vld [vmem:[%s0 + $0x378] sm:$0xff]
  %v215 = vld [vmem:[%s0 + $0x380] sm:$0xff]
  %v216 = vld [vmem:[%s0 + $0x388] sm:$0xff]
  %v217 = vld [vmem:[%s0 + $0x390] sm:$0xff]
  %v218 = vld [vmem:[%s0 + $0x398] sm:$0xff]
  %v219 = vld [vmem:[%s0 + $0x3a0] sm:$0xff]
  %v220 = vld [vmem:[%s0 + $0x3a8] sm:$0xff]
  %v221 = vld [vmem:[%s0 + $0x3b0] sm:$0xff]
  %v222 = vld [vmem:[%s0 + $0x3b8] sm:$0xff]
  %v223 = vld [vmem:[%s0 + $0x3c0] sm:$0xff]
  %v224 = vld [vmem:[%s0 + $0x3c8] sm:$0xff]
  %v225 = vld [vmem:[%s0 + $0x3d0] sm:$0xff]
  %v226 = vld [vmem:[%s0 + $0x3d8] sm:$0xff]
  %v227 = vld [vmem:[%s0 + $0x3e0] sm:$0xff]
  %v228 = vld [vmem:[%s0 + $0x3e8] sm:$0xff]
  %v229 = vld [vmem:[%s0 + $0x3f0] sm:$0xff]
  %v230 = vld [vmem:[%s0 + $0x3f8] sm:$0xff]
  %v231 = vld [vmem:[%s0 + $0x400] sm:$0xff]
  %v232 = vld [vmem:[%s0 + $0x408] sm:$0xff]
  %v233 = vld [vmem:[%s0 + $0x410] sm:$0xff]
  %v234 = vld [vmem:[%s0 + $0x418] sm:$0xff]
  %v235 = vld [vmem:[%s0 + $0x420] sm:$0xff]
  %v236 = vld [vmem:[%s0 + $0x428] sm:$0xff]
  %v237 = vld [vmem:[%s0 + $0x430] sm:$0xff]
  %v238 = vld [vmem:[%s0 + $0x438] sm:$0xff]
  %v239 = vld [vmem:[%s0 + $0x440] sm:$0xff]
  %v240 = vld [vmem:[%s0 + $0x448] sm:$0xff]
  %v241 = vld [vmem:[%s0 + $0x450] sm:$0xff]
  %v242 = vld [vmem:[%s0 + $0x458] sm:$0xff]
  %v243 = vld [vmem:[%s0 + $0x460] sm:$0xff]
  %v244 = vld [vmem:[%s0 + $0x468] sm:$0xff]
  %v245 = vld [vmem:[%s0 + $0x470] sm:$0xff]
  %v246 = vld [vmem:[%s0 + $0x478] sm:$0xff]
  %v247 = vld [vmem:[%s0 + $0x480] sm:$0xff]
  %v248 = vld [vmem:[%s0 + $0x488] sm:$0xff]
  %v249 = vld [vmem:[%s0 + $0x490] sm:$0xff]
  %v250 = vld [vmem:[%s0 + $0x498] sm:$0xff]
  %v251 = vld [vmem:[%s0 + $0x4a0] sm:$0xff]
  %v252 = vld [vmem:[%s0 + $0x4a8] sm:$0xff]
  %v253 = vld [vmem:[%s0 + $0x4b0] sm:$0xff]
  %v254 = vld [vmem:[%s0 + $0x4b8] sm:$0xff]
  %v255 = vld [vmem:[%s0 + $0x4c0] sm:$0xff]
  %v256 = vld [vmem:[%s0 + $0x4c8] sm:$0xff]
  %v257 = vld [vmem:[%s0 + $0x4d0] sm:$0xff]
  %v258 = vld [vmem:[%s0 + $0x4d8] sm:$0xff]
  %v259 = vld [vmem:[%s0 + $0x4e0] sm:$0xff]
  %v260 = vld [vmem:[%s0 + $0x4e8] sm:$0xff]
  %v261 = vld [vmem:[%s0 + $0x4f0] sm:$0xff]
  %v262 = vld [vmem:[%s0 + $0x4f8] sm:$0xff]
  %v263 = vld [vmem:[%s0 + $0x500] sm:$0xff]
  %v264 = vld [vmem:[%s0 + $0x508] sm:$0xff]
  %v265 = vld [vmem:[%s0 + $0x510] sm:$0xff]
  %v266 = vld [vmem:[%s0 + $0x518] sm:$0xff]
  %v267 = vld [vmem:[%s0 + $0x520] sm:$0xff]
  %v268 = vld [vmem:[%s0 + $0x528] sm:$0xff]
  %v269 = vld [vmem:[%s0 + $0x530] sm:$0xff]
  %v270 = vld [vmem:[%s0 + $0x538] sm:$0xff]
  %v271 = vld [vmem:[%s0 + $0x540] sm:$0xff]
  %v272 = vld [vmem:[%s0 + $0x548] sm:$0xff]
  %v273 = vld [vmem:[%s0 + $0x550] sm:$0xff]
  %v274 = vld [vmem:[%s0 + $0x558] sm:$0xff]
  %v275 = vld [vmem:[%s0 + $0x560] sm:$0xff]
  %v276 = vld [vmem:[%s0 + $0x568] sm:$0xff]
  %v277 = vld [vmem:[%s0 + $0x570] sm:$0xff]
  %v278 = vld [vmem:[%s0 + $0x578] sm:$0xff]
  %v279 = vld [vmem:[%s0 + $0x580] sm:$0xff]
  %v280 = vld [vmem:[%s0 + $0x588] sm:$0xff]
  %v281 = vld [vmem:[%s0 + $0x590] sm:$0xff]
  %v282 = vld [vmem:[%s0 + $0x598] sm:$0xff]
  %v283 = vld [vmem:[%s0 + $0x5a0] sm:$0xff]
  %v284 = vld [vmem:[%s0 + $0x5a8] sm:$0xff]
  %v285 = vld [vmem:[%s0 + $0x5b0] sm:$0xff]
  %v286 = vld [vmem:[%s0 + $0x5b8] sm:$0xff]
  %v287 = vld [vmem:[%s0 + $0x5c0] sm:$0xff]
  %v288 = vld [vmem:[%s0 + $0x5c8] sm:$0xff]
  %v289 = vld [vmem:[%s0 + $0x5d0] sm:$0xff]
  %v290 = vld [vmem:[%s0 + $0x5d8] sm:$0xff]
  %v291 = vld [vmem:[%s0 + $0x5e0] sm:$0xff]
  %v292 = vld [vmem:[%s0 + $0x5e8] sm:$0xff]
  %v293 = vld [vmem:[%s0 + $0x5f0] sm:$0xff]
  %v294 = vld [vmem:[%s0 + $0x5f8] sm:$0xff]
  %v295 = vld [vmem:[%s0 + $0x600] sm:$0xff]
  %v296 = vld [vmem:[%s0 + $0x608] sm:$0xff]
  %v297 = vld [vmem:[%s0 + $0x610] sm:$0xff]
  %v298 = vld [vmem:[%s0 + $0x618] sm:$0xff]
  %v299 = vld [vmem:[%s0 + $0x620] sm:$0xff]
  %v300 = vld [vmem:[%s0 + $0x628] sm:$0xff]
  %v301 = vld [vmem:[%s0 + $0x630] sm:$0xff]
  %v302 = vld [vmem:[%s0 + $0x638] sm:$0xff]
  %v303 = vld [vmem:[%s0 + $0x640] sm:$0xff]
  %v304 = vld [vmem:[%s0 + $0x648] sm:$0xff]
  %v305 = vld [vmem:[%s0 + $0x650] sm:$0xff]
  %v306 = vld [vmem:[%s0 + $0x658] sm:$0xff]
  %v307 = vld [vmem:[%s0 + $0x660] sm:$0xff]
  %v308 = vld [vmem:[%s0 + $0x668] sm:$0xff]
  %v309 = vld [vmem:[%s0 + $0x670] sm:$0xff]
  %v310 = vld [vmem:[%s0 + $0x678] sm:$0xff]
  %v311 = vld [vmem:[%s0 + $0x680] sm:$0xff]
  %v312 = vld [vmem:[%s0 + $0x688] sm:$0xff]
  %v313 = vld [vmem:[%s0 + $0x690] sm:$0xff]
  %v314 = vld [vmem:[%s0 + $0x698] sm:$0xff]
  %v315 = vld [vmem:[%s0 + $0x6a0] sm:$0xff]
  %v316 = vld [vmem:[%s0 + $0x6a8] sm:$0xff]
  %v317 = vld [vmem:[%s0 + $0x6b0] sm:$0xff]
  %v318 = vld [vmem:[%s0 + $0x6b8] sm:$0xff]
  %v319 = vld [vmem:[%s0 + $0x6c0] sm:$0xff]
  %v320 = vld [vmem:[%s0 + $0x6c8] sm:$0xff]
  %v321 = vld [vmem:[%s0 + $0x6d0] sm:$0xff]
  %v322 = vld [vmem:[%s0 + $0x6d8] sm:$0xff]
  %v323 = vld [vmem:[%s0 + $0x6e0] sm:$0xff]
  %v324 = vld [vmem:[%s0 + $0x6e8] sm:$0xff]
  %v325 = vld [vmem:[%s0 + $0x6f0] sm:$0xff]
  %v326 = vld [vmem:[%s0 + $0x6f8] sm:$0xff]
  %v327 = vld [vmem:[%s0 + $0x700] sm:$0xff]
  %v328 = vld [vmem:[%s0 + $0x708] sm:$0xff]
  %v329 = vld [vmem:[%s0 + $0x710] sm:$0xff]
  %v330 = vld [vmem:[%s0 + $0x718] sm:$0xff]
  %v331 = vld [vmem:[%s0 + $0x720] sm:$0xff]
  %v332 = vld [vmem:[%s0 + $0x728] sm:$0xff]
  %v333 = vld [vmem:[%s0 + $0x730] sm:$0xff]
  %v334 = vld [vmem:[%s0 + $0x738] sm:$0xff]
  %v335 = vld [vmem:[%s0 + $0x740] sm:$0xff]
  %v336 = vld [vmem:[%s0 + $0x748] sm:$0xff]
  %v337 = vld [vmem:[%s0 + $0x750] sm:$0xff]
  %v338 = vld [vmem:[%s0 + $0x758] sm:$0xff]
  %v339 = vld [vmem:[%s0 + $0x760] sm:$0xff]
  %v340 = vld [vmem:[%s0 + $0x768] sm:$0xff]
  %v341 = vld [vmem:[%s0 + $0x770] sm:$0xff]
  %v342 = vld [vmem:[%s0 + $0x778] sm:$0xff]
  %v343 = vld [vmem:[%s0 + $0x780] sm:$0xff]
  %v344 = vld [vmem:[%s0 + $0x788] sm:$0xff]
  %v345 = vld [vmem:[%s0 + $0x790] sm:$0xff]
  %v346 = vld [vmem:[%s0 + $0x798] sm:$0xff]
  %v347 = vld [vmem:[%s0 + $0x7a0] sm:$0xff]
  %v348 = vld [vmem:[%s0 + $0x7a8] sm:$0xff]
  %v349 = vld [vmem:[%s0 + $0x7b0] sm:$0xff]
  %v350 = vld [vmem:[%s0 + $0x7b8] sm:$0xff]
  %v351 = vld [vmem:[%s0 + $0x7c0] sm:$0xff]
  %v352 = vld [vmem:[%s0 + $0x7c8] sm:$0xff]
  %v353 = vld [vmem:[%s0 + $0x7d0] sm:$0xff]
  %v354 = vld [vmem:[%s0 + $0x7d8] sm:$0xff]
  %v355 = vld [vmem:[%s0 + $0x7e0] sm:$0xff]
  %v356 = vld [vmem:[%s0 + $0x7e8] sm:$0xff]
  %v357 = vld [vmem:[%s0 + $0x7f0] sm:$0xff]
  %v358 = vld [vmem:[%s0 + $0x7f8] sm:$0xff]
  %360 = vset.pattern.permute.xlu0 0
  %361 = vperm.xlu0 %360, %v87
  %v362 = vpop.permute.xlu0 %361
  %365 = vset.pattern.permute.xlu0 0
  %366 = vperm.xlu0 %365, %v88
  %v367 = vpop.permute.xlu0 %366
  %370 = vset.pattern.permute.xlu0 0
  %371 = vperm.xlu0 %370, %v89
  %v372 = vpop.permute.xlu0 %371
  %375 = vset.pattern.permute.xlu0 0
  %376 = vperm.xlu0 %375, %v90
  %v377 = vpop.permute.xlu0 %376
  %379 = vmatprep.subr.mxu0 0.0
  %380 = vmatpush1.msra.mxu0 %v103
  %381 = vmatprep.subr.mxu0 0.0
  %382 = vmatpush1.msra.mxu0 %v104
  %383 = vmatprep.subr.mxu0 0.0
  %384 = vmatpush1.msra.mxu0 %v105
  %385 = vmatprep.subr.mxu0 0.0
  %386 = vmatpush1.msra.mxu0 %v106
  %387 = vmatprep.subr.mxu0 0.0
  %388 = vmatpush1.msra.mxu0 %v107
  %389 = vmatprep.subr.mxu0 0.0
  %390 = vmatpush1.msra.mxu0 %v108
  %391 = vmatprep.subr.mxu0 0.0
  %392 = vmatpush1.msra.mxu0 %v109
  %393 = vmatprep.subr.mxu0 0.0
  %394 = vmatpush1.msra.mxu0 %v110
  %395 = vmatprep.subr.mxu0 0.0
  %396 = vmatpush1.msra.mxu0 %v111
  %397 = vmatprep.subr.mxu0 0.0
  %398 = vmatpush1.msra.mxu0 %v112
  %399 = vmatprep.subr.mxu0 0.0
  %400 = vmatpush1.msra.mxu0 %v113
  %401 = vmatprep.subr.mxu0 0.0
  %402 = vmatpush1.msra.mxu0 %v114
  %403 = vmatprep.subr.mxu0 0.0
  %404 = vmatpush1.msra.mxu0 %v115
  %405 = vmatprep.subr.mxu0 0.0
  %406 = vmatpush1.msra.mxu0 %v116
  %407 = vmatprep.subr.mxu0 0.0
  %408 = vmatpush1.msra.mxu0 %v117
  %409 = vmatprep.subr.mxu0 0.0
  %410 = vmatpush1.msra.mxu0 %v118
  %411 = vmatprep.subr.mxu0 0.0
  %412 = vmatpush1.msra.mxu0 %v119
  %413 = vmatprep.subr.mxu0 0.0
  %414 = vmatpush1.msra.mxu0 %v120
  %415 = vmatprep.subr.mxu0 0.0
  %416 = vmatpush1.msra.mxu0 %v121
  %417 = vmatprep.subr.mxu0 0.0
  %418 = vmatpush1.msra.mxu0 %v122
  %419 = vmatprep.subr.mxu0 0.0
  %420 = vmatpush1.msra.mxu0 %v123
  %421 = vmatprep.subr.mxu0 0.0
  %422 = vmatpush1.msra.mxu0 %v124
  %423 = vmatprep.subr.mxu0 0.0
  %424 = vmatpush1.msra.mxu0 %v125
  %425 = vmatprep.subr.mxu0 0.0
  %426 = vmatpush1.msra.mxu0 %v126
  %427 = vmatprep.subr.mxu0 0.0
  %428 = vmatpush1.msra.mxu0 %v127
  %429 = vmatprep.subr.mxu0 0.0
  %430 = vmatpush1.msra.mxu0 %v128
  %431 = vmatprep.subr.mxu0 0.0
  %432 = vmatpush1.msra.mxu0 %v129
  %433 = vmatprep.subr.mxu0 0.0
  %434 = vmatpush1.msra.mxu0 %v130
  %435 = vmatprep.subr.mxu0 0.0
  %436 = vmatpush1.msra.mxu0 %v131
  %437 = vmatprep.subr.mxu0 0.0
  %438 = vmatpush1.msra.mxu0 %v132
  %439 = vmatprep.subr.mxu0 0.0
  %440 = vmatpush1.msra.mxu0 %v133
  %441 = vmatprep.subr.mxu0 0.0
  %442 = vmatpush1.msra.mxu0 %v134
  %443 = vmatprep.mubr.f32.mxu0 %v24
  %444 = vmatmul.mubr.f32.gmra.mrb[0].mxu0 %v23
  %v445 = vpop.f32.mrb[0].mxu0
  %v446 = vadd.f32 %v362, %v445
  %v447 = vpop.f32.mrb[0].mxu0
  %448 = vmatprep.mubr.f32.mxu0 %v40
  %449 = vmatmul.mubr.f32.gmra.mrb[0].mxu0 %v39
  %v450 = vpop.f32.mrb[0].mxu0
  %v451 = vadd.f32 %v367, %v450
  %v452 = vpop.f32.mrb[0].mxu0
  %453 = vmatprep.mubr.f32.mxu0 %v56
  %454 = vmatmul.mubr.f32.gmra.mrb[0].mxu0 %v55
  %v455 = vpop.f32.mrb[0].mxu0
  %v456 = vadd.f32 %v372, %v455
  %v457 = vpop.f32.mrb[0].mxu0
  %458 = vmatprep.mubr.f32.mxu0 %v72
  %459 = vmatmul.mubr.f32.gmra.mrb[0].mxu0 %v71
  %v460 = vpop.f32.mrb[0].mxu0
  %v461 = vadd.f32 %v377, %v460
  %v462 = vpop.f32.mrb[0].mxu0
  %463 = vdwg.mxu0
  %464 = vmatprep.subr.mxu0 0.0
  %465 = vmatpush1.msra.mxu0 %v135
  %466 = vmatprep.subr.mxu0 0.0
  %467 = vmatpush1.msra.mxu0 %v136
  %468 = vmatprep.subr.mxu0 0.0
  %469 = vmatpush1.msra.mxu0 %v137
  %470 = vmatprep.subr.mxu0 0.0
  %471 = vmatpush1.msra.mxu0 %v138
  %472 = vmatprep.subr.mxu0 0.0
  %473 = vmatpush1.msra.mxu0 %v139
  %474 = vmatprep.subr.mxu0 0.0
  %475 = vmatpush1.msra.mxu0 %v140
  %476 = vmatprep.subr.mxu0 0.0
  %477 = vmatpush1.msra.mxu0 %v141
  %478 = vmatprep.subr.mxu0 0.0
  %479 = vmatpush1.msra.mxu0 %v142
  %480 = vmatprep.subr.mxu0 0.0
  %481 = vmatpush1.msra.mxu0 %v143
  %482 = vmatprep.subr.mxu0 0.0
  %483 = vmatpush1.msra.mxu0 %v144
  %484 = vmatprep.subr.mxu0 0.0
  %485 = vmatpush1.msra.mxu0 %v145
  %486 = vmatprep.subr.mxu0 0.0
  %487 = vmatpush1.msra.mxu0 %v146
  %488 = vmatprep.subr.mxu0 0.0
  %489 = vmatpush1.msra.mxu0 %v147
  %490 = vmatprep.subr.mxu0 0.0
  %491 = vmatpush1.msra.mxu0 %v148
  %492 = vmatprep.subr.mxu0 0.0
  %493 = vmatpush1.msra.mxu0 %v149
  %494 = vmatprep.subr.mxu0 0.0
  %495 = vmatpush1.msra.mxu0 %v150
  %496 = vmatprep.subr.mxu0 0.0
  %497 = vmatpush1.msra.mxu0 %v151
  %498 = vmatprep.subr.mxu0 0.0
  %499 = vmatpush1.msra.mxu0 %v152
  %500 = vmatprep.subr.mxu0 0.0
  %501 = vmatpush1.msra.mxu0 %v153
  %502 = vmatprep.subr.mxu0 0.0
  %503 = vmatpush1.msra.mxu0 %v154
  %504 = vmatprep.subr.mxu0 0.0
  %505 = vmatpush1.msra.mxu0 %v155
  %506 = vmatprep.subr.mxu0 0.0
  %507 = vmatpush1.msra.mxu0 %v156
  %508 = vmatprep.subr.mxu0 0.0
  %509 = vmatpush1.msra.mxu0 %v157
  %510 = vmatprep.subr.mxu0 0.0
  %511 = vmatpush1.msra.mxu0 %v158
  %512 = vmatprep.subr.mxu0 0.0
  %513 = vmatpush1.msra.mxu0 %v159
  %514 = vmatprep.subr.mxu0 0.0
  %515 = vmatpush1.msra.mxu0 %v160
  %516 = vmatprep.subr.mxu0 0.0
  %517 = vmatpush1.msra.mxu0 %v161
  %518 = vmatprep.subr.mxu0 0.0
  %519 = vmatpush1.msra.mxu0 %v162
  %520 = vmatprep.subr.mxu0 0.0
  %521 = vmatpush1.msra.mxu0 %v163
  %522 = vmatprep.subr.mxu0 0.0
  %523 = vmatpush1.msra.mxu0 %v164
  %524 = vmatprep.subr.mxu0 0.0
  %525 = vmatpush1.msra.mxu0 %v165
  %526 = vmatprep.subr.mxu0 0.0
  %527 = vmatpush1.msra.mxu0 %v166
  %528 = vmatprep.mubr.f32.mxu0 %v26
  %529 = vmatmul.mubr.f32.gmra.mrb[0].mxu0 %v25
  %v530 = vpop.f32.mrb[0].mxu0
  %v531 = vadd.f32 %v446, %v530
  %v532 = vpop.f32.mrb[0].mxu0
  %533 = vmatprep.mubr.f32.mxu0 %v42
  %534 = vmatmul.mubr.f32.gmra.mrb[0].mxu0 %v41
  %v535 = vpop.f32.mrb[0].mxu0
  %v536 = vadd.f32 %v451, %v535
  %v537 = vpop.f32.mrb[0].mxu0
  %538 = vmatprep.mubr.f32.mxu0 %v58
  %539 = vmatmul.mubr.f32.gmra.mrb[0].mxu0 %v57
  %v540 = vpop.f32.mrb[0].mxu0
  %v541 = vadd.f32 %v456, %v540
  %v542 = vpop.f32.mrb[0].mxu0
  %543 = vmatprep.mubr.f32.mxu0 %v74
  %544 = vmatmul.mubr.f32.gmra.mrb[0].mxu0 %v73
  %v545 = vpop.f32.mrb[0].mxu0
  %v546 = vadd.f32 %v461, %v545
  %v547 = vpop.f32.mrb[0].mxu0
  %548 = vdwg.mxu0
  %549 = vmatprep.subr.mxu0 0.0
  %550 = vmatpush1.msra.mxu0 %v167
  %551 = vmatprep.subr.mxu0 0.0
  %552 = vmatpush1.msra.mxu0 %v168
  %553 = vmatprep.subr.mxu0 0.0
  %554 = vmatpush1.msra.mxu0 %v169
  %555 = vmatprep.subr.mxu0 0.0
  %556 = vmatpush1.msra.mxu0 %v170
  %557 = vmatprep.subr.mxu0 0.0
  %558 = vmatpush1.msra.mxu0 %v171
  %559 = vmatprep.subr.mxu0 0.0
  %560 = vmatpush1.msra.mxu0 %v172
  %561 = vmatprep.subr.mxu0 0.0
  %562 = vmatpush1.msra.mxu0 %v173
  %563 = vmatprep.subr.mxu0 0.0
  %564 = vmatpush1.msra.mxu0 %v174
  %565 = vmatprep.subr.mxu0 0.0
  %566 = vmatpush1.msra.mxu0 %v175
  %567 = vmatprep.subr.mxu0 0.0
  %568 = vmatpush1.msra.mxu0 %v176
  %569 = vmatprep.subr.mxu0 0.0
  %570 = vmatpush1.msra.mxu0 %v177
  %571 = vmatprep.subr.mxu0 0.0
  %572 = vmatpush1.msra.mxu0 %v178
  %573 = vmatprep.subr.mxu0 0.0
  %574 = vmatpush1.msra.mxu0 %v179
  %575 = vmatprep.subr.mxu0 0.0
  %576 = vmatpush1.msra.mxu0 %v180
  %577 = vmatprep.subr.mxu0 0.0
  %578 = vmatpush1.msra.mxu0 %v181
  %579 = vmatprep.subr.mxu0 0.0
  %580 = vmatpush1.msra.mxu0 %v182
  %581 = vmatprep.subr.mxu0 0.0
  %582 = vmatpush1.msra.mxu0 %v183
  %583 = vmatprep.subr.mxu0 0.0
  %584 = vmatpush1.msra.mxu0 %v184
  %585 = vmatprep.subr.mxu0 0.0
  %586 = vmatpush1.msra.mxu0 %v185
  %587 = vmatprep.subr.mxu0 0.0
  %588 = vmatpush1.msra.mxu0 %v186
  %589 = vmatprep.subr.mxu0 0.0
  %590 = vmatpush1.msra.mxu0 %v187
  %591 = vmatprep.subr.mxu0 0.0
  %592 = vmatpush1.msra.mxu0 %v188
  %593 = vmatprep.subr.mxu0 0.0
  %594 = vmatpush1.msra.mxu0 %v189
  %595 = vmatprep.subr.mxu0 0.0
  %596 = vmatpush1.msra.mxu0 %v190
  %597 = vmatprep.subr.mxu0 0.0
  %598 = vmatpush1.msra.mxu0 %v191
  %599 = vmatprep.subr.mxu0 0.0
  %600 = vmatpush1.msra.mxu0 %v192
  %601 = vmatprep.subr.mxu0 0.0
  %602 = vmatpush1.msra.mxu0 %v193
  %603 = vmatprep.subr.mxu0 0.0
  %604 = vmatpush1.msra.mxu0 %v194
  %605 = vmatprep.subr.mxu0 0.0
  %606 = vmatpush1.msra.mxu0 %v195
  %607 = vmatprep.subr.mxu0 0.0
  %608 = vmatpush1.msra.mxu0 %v196
  %609 = vmatprep.subr.mxu0 0.0
  %610 = vmatpush1.msra.mxu0 %v197
  %611 = vmatprep.subr.mxu0 0.0
  %612 = vmatpush1.msra.mxu0 %v198
  %613 = vmatprep.mubr.f32.mxu0 %v28
  %614 = vmatmul.mubr.f32.gmra.mrb[0].mxu0 %v27
  %v615 = vpop.f32.mrb[0].mxu0
  %v616 = vadd.f32 %v531, %v615
  %v617 = vpop.f32.mrb[0].mxu0
  %618 = vmatprep.mubr.f32.mxu0 %v44
  %619 = vmatmul.mubr.f32.gmra.mrb[0].mxu0 %v43
  %v620 = vpop.f32.mrb[0].mxu0
  %v621 = vadd.f32 %v536, %v620
  %v622 = vpop.f32.mrb[0].mxu0
  %623 = vmatprep.mubr.f32.mxu0 %v60
  %624 = vmatmul.mubr.f32.gmra.mrb[0].mxu0 %v59
  %v625 = vpop.f32.mrb[0].mxu0
  %v626 = vadd.f32 %v541, %v625
  %v627 = vpop.f32.mrb[0].mxu0
  %628 = vmatprep.mubr.f32.mxu0 %v76
  %629 = vmatmul.mubr.f32.gmra.mrb[0].mxu0 %v75
  %v630 = vpop.f32.mrb[0].mxu0
  %v631 = vadd.f32 %v546, %v630
  %v632 = vpop.f32.mrb[0].mxu0
  %633 = vdwg.mxu0
  %634 = vmatprep.subr.mxu0 0.0
  %635 = vmatpush1.msra.mxu0 %v199
  %636 = vmatprep.subr.mxu0 0.0
  %637 = vmatpush1.msra.mxu0 %v200
  %638 = vmatprep.subr.mxu0 0.0
  %639 = vmatpush1.msra.mxu0 %v201
  %640 = vmatprep.subr.mxu0 0.0
  %641 = vmatpush1.msra.mxu0 %v202
  %642 = vmatprep.subr.mxu0 0.0
  %643 = vmatpush1.msra.mxu0 %v203
  %644 = vmatprep.subr.mxu0 0.0
  %645 = vmatpush1.msra.mxu0 %v204
  %646 = vmatprep.subr.mxu0 0.0
  %647 = vmatpush1.msra.mxu0 %v205
  %648 = vmatprep.subr.mxu0 0.0
  %649 = vmatpush1.msra.mxu0 %v206
  %650 = vmatprep.subr.mxu0 0.0
  %651 = vmatpush1.msra.mxu0 %v207
  %652 = vmatprep.subr.mxu0 0.0
  %653 = vmatpush1.msra.mxu0 %v208
  %654 = vmatprep.subr.mxu0 0.0
  %655 = vmatpush1.msra.mxu0 %v209
  %656 = vmatprep.subr.mxu0 0.0
  %657 = vmatpush1.msra.mxu0 %v210
  %658 = vmatprep.subr.mxu0 0.0
  %659 = vmatpush1.msra.mxu0 %v211
  %660 = vmatprep.subr.mxu0 0.0
  %661 = vmatpush1.msra.mxu0 %v212
  %662 = vmatprep.subr.mxu0 0.0
  %663 = vmatpush1.msra.mxu0 %v213
  %664 = vmatprep.subr.mxu0 0.0
  %665 = vmatpush1.msra.mxu0 %v214
  %666 = vmatprep.subr.mxu0 0.0
  %667 = vmatpush1.msra.mxu0 %v215
  %668 = vmatprep.subr.mxu0 0.0
  %669 = vmatpush1.msra.mxu0 %v216
  %670 = vmatprep.subr.mxu0 0.0
  %671 = vmatpush1.msra.mxu0 %v217
  %672 = vmatprep.subr.mxu0 0.0
  %673 = vmatpush1.msra.mxu0 %v218
  %674 = vmatprep.subr.mxu0 0.0
  %675 = vmatpush1.msra.mxu0 %v219
  %676 = vmatprep.subr.mxu0 0.0
  %677 = vmatpush1.msra.mxu0 %v220
  %678 = vmatprep.subr.mxu0 0.0
  %679 = vmatpush1.msra.mxu0 %v221
  %680 = vmatprep.subr.mxu0 0.0
  %681 = vmatpush1.msra.mxu0 %v222
  %682 = vmatprep.subr.mxu0 0.0
  %683 = vmatpush1.msra.mxu0 %v223
  %684 = vmatprep.subr.mxu0 0.0
  %685 = vmatpush1.msra.mxu0 %v224
  %686 = vmatprep.subr.mxu0 0.0
  %687 = vmatpush1.msra.mxu0 %v225
  %688 = vmatprep.subr.mxu0 0.0
  %689 = vmatpush1.msra.mxu0 %v226
  %690 = vmatprep.subr.mxu0 0.0
  %691 = vmatpush1.msra.mxu0 %v227
  %692 = vmatprep.subr.mxu0 0.0
  %693 = vmatpush1.msra.mxu0 %v228
  %694 = vmatprep.subr.mxu0 0.0
  %695 = vmatpush1.msra.mxu0 %v229
  %696 = vmatprep.subr.mxu0 0.0
  %697 = vmatpush1.msra.mxu0 %v230
  %698 = vmatprep.mubr.f32.mxu0 %v30
  %699 = vmatmul.mubr.f32.gmra.mrb[0].mxu0 %v29
  %v700 = vpop.f32.mrb[0].mxu0
  %v701 = vadd.f32 %v616, %v700
  %v702 = vpop.f32.mrb[0].mxu0
  %703 = vmatprep.mubr.f32.mxu0 %v46
  %704 = vmatmul.mubr.f32.gmra.mrb[0].mxu0 %v45
  %v705 = vpop.f32.mrb[0].mxu0
  %v706 = vadd.f32 %v621, %v705
  %v707 = vpop.f32.mrb[0].mxu0
  %708 = vmatprep.mubr.f32.mxu0 %v62
  %709 = vmatmul.mubr.f32.gmra.mrb[0].mxu0 %v61
  %v710 = vpop.f32.mrb[0].mxu0
  %v711 = vadd.f32 %v626, %v710
  %v712 = vpop.f32.mrb[0].mxu0
  %713 = vmatprep.mubr.f32.mxu0 %v78
  %714 = vmatmul.mubr.f32.gmra.mrb[0].mxu0 %v77
  %v715 = vpop.f32.mrb[0].mxu0
  %v716 = vadd.f32 %v631, %v715
  %v717 = vpop.f32.mrb[0].mxu0
  %718 = vdwg.mxu0
  %719 = vmatprep.subr.mxu0 0.0
  %720 = vmatpush1.msra.mxu0 %v231
  %721 = vmatprep.subr.mxu0 0.0
  %722 = vmatpush1.msra.mxu0 %v232
  %723 = vmatprep.subr.mxu0 0.0
  %724 = vmatpush1.msra.mxu0 %v233
  %725 = vmatprep.subr.mxu0 0.0
  %726 = vmatpush1.msra.mxu0 %v234
  %727 = vmatprep.subr.mxu0 0.0
  %728 = vmatpush1.msra.mxu0 %v235
  %729 = vmatprep.subr.mxu0 0.0
  %730 = vmatpush1.msra.mxu0 %v236
  %731 = vmatprep.subr.mxu0 0.0
  %732 = vmatpush1.msra.mxu0 %v237
  %733 = vmatprep.subr.mxu0 0.0
  %734 = vmatpush1.msra.mxu0 %v238
  %735 = vmatprep.subr.mxu0 0.0
  %736 = vmatpush1.msra.mxu0 %v239
  %737 = vmatprep.subr.mxu0 0.0
  %738 = vmatpush1.msra.mxu0 %v240
  %739 = vmatprep.subr.mxu0 0.0
  %740 = vmatpush1.msra.mxu0 %v241
  %741 = vmatprep.subr.mxu0 0.0
  %742 = vmatpush1.msra.mxu0 %v242
  %743 = vmatprep.subr.mxu0 0.0
  %744 = vmatpush1.msra.mxu0 %v243
  %745 = vmatprep.subr.mxu0 0.0
  %746 = vmatpush1.msra.mxu0 %v244
  %747 = vmatprep.subr.mxu0 0.0
  %748 = vmatpush1.msra.mxu0 %v245
  %749 = vmatprep.subr.mxu0 0.0
  %750 = vmatpush1.msra.mxu0 %v246
  %751 = vmatprep.subr.mxu0 0.0
  %752 = vmatpush1.msra.mxu0 %v247
  %753 = vmatprep.subr.mxu0 0.0
  %754 = vmatpush1.msra.mxu0 %v248
  %755 = vmatprep.subr.mxu0 0.0
  %756 = vmatpush1.msra.mxu0 %v249
  %757 = vmatprep.subr.mxu0 0.0
  %758 = vmatpush1.msra.mxu0 %v250
  %759 = vmatprep.subr.mxu0 0.0
  %760 = vmatpush1.msra.mxu0 %v251
  %761 = vmatprep.subr.mxu0 0.0
  %762 = vmatpush1.msra.mxu0 %v252
  %763 = vmatprep.subr.mxu0 0.0
  %764 = vmatpush1.msra.mxu0 %v253
  %765 = vmatprep.subr.mxu0 0.0
  %766 = vmatpush1.msra.mxu0 %v254
  %767 = vmatprep.subr.mxu0 0.0
  %768 = vmatpush1.msra.mxu0 %v255
  %769 = vmatprep.subr.mxu0 0.0
  %770 = vmatpush1.msra.mxu0 %v256
  %771 = vmatprep.subr.mxu0 0.0
  %772 = vmatpush1.msra.mxu0 %v257
  %773 = vmatprep.subr.mxu0 0.0
  %774 = vmatpush1.msra.mxu0 %v258
  %775 = vmatprep.subr.mxu0 0.0
  %776 = vmatpush1.msra.mxu0 %v259
  %777 = vmatprep.subr.mxu0 0.0
  %778 = vmatpush1.msra.mxu0 %v260
  %779 = vmatprep.subr.mxu0 0.0
  %780 = vmatpush1.msra.mxu0 %v261
  %781 = vmatprep.subr.mxu0 0.0
  %782 = vmatpush1.msra.mxu0 %v262
  %783 = vmatprep.mubr.f32.mxu0 %v32
  %784 = vmatmul.mubr.f32.gmra.mrb[0].mxu0 %v31
  %v785 = vpop.f32.mrb[0].mxu0
  %v786 = vadd.f32 %v701, %v785
  %v787 = vpop.f32.mrb[0].mxu0
  %788 = vmatprep.mubr.f32.mxu0 %v48
  %789 = vmatmul.mubr.f32.gmra.mrb[0].mxu0 %v47
  %v790 = vpop.f32.mrb[0].mxu0
  %v791 = vadd.f32 %v706, %v790
  %v792 = vpop.f32.mrb[0].mxu0
  %793 = vmatprep.mubr.f32.mxu0 %v64
  %794 = vmatmul.mubr.f32.gmra.mrb[0].mxu0 %v63
  %v795 = vpop.f32.mrb[0].mxu0
  %v796 = vadd.f32 %v711, %v795
  %v797 = vpop.f32.mrb[0].mxu0
  %798 = vmatprep.mubr.f32.mxu0 %v80
  %799 = vmatmul.mubr.f32.gmra.mrb[0].mxu0 %v79
  %v800 = vpop.f32.mrb[0].mxu0
  %v801 = vadd.f32 %v716, %v800
  %v802 = vpop.f32.mrb[0].mxu0
  %803 = vdwg.mxu0
  %804 = vmatprep.subr.mxu0 0.0
  %805 = vmatpush1.msra.mxu0 %v263
  %806 = vmatprep.subr.mxu0 0.0
  %807 = vmatpush1.msra.mxu0 %v264
  %808 = vmatprep.subr.mxu0 0.0
  %809 = vmatpush1.msra.mxu0 %v265
  %810 = vmatprep.subr.mxu0 0.0
  %811 = vmatpush1.msra.mxu0 %v266
  %812 = vmatprep.subr.mxu0 0.0
  %813 = vmatpush1.msra.mxu0 %v267
  %814 = vmatprep.subr.mxu0 0.0
  %815 = vmatpush1.msra.mxu0 %v268
  %816 = vmatprep.subr.mxu0 0.0
  %817 = vmatpush1.msra.mxu0 %v269
  %818 = vmatprep.subr.mxu0 0.0
  %819 = vmatpush1.msra.mxu0 %v270
  %820 = vmatprep.subr.mxu0 0.0
  %821 = vmatpush1.msra.mxu0 %v271
  %822 = vmatprep.subr.mxu0 0.0
  %823 = vmatpush1.msra.mxu0 %v272
  %824 = vmatprep.subr.mxu0 0.0
  %825 = vmatpush1.msra.mxu0 %v273
  %826 = vmatprep.subr.mxu0 0.0
  %827 = vmatpush1.msra.mxu0 %v274
  %828 = vmatprep.subr.mxu0 0.0
  %829 = vmatpush1.msra.mxu0 %v275
  %830 = vmatprep.subr.mxu0 0.0
  %831 = vmatpush1.msra.mxu0 %v276
  %832 = vmatprep.subr.mxu0 0.0
  %833 = vmatpush1.msra.mxu0 %v277
  %834 = vmatprep.subr.mxu0 0.0
  %835 = vmatpush1.msra.mxu0 %v278
  %836 = vmatprep.subr.mxu0 0.0
  %837 = vmatpush1.msra.mxu0 %v279
  %838 = vmatprep.subr.mxu0 0.0
  %839 = vmatpush1.msra.mxu0 %v280
  %840 = vmatprep.subr.mxu0 0.0
  %841 = vmatpush1.msra.mxu0 %v281
  %842 = vmatprep.subr.mxu0 0.0
  %843 = vmatpush1.msra.mxu0 %v282
  %844 = vmatprep.subr.mxu0 0.0
  %845 = vmatpush1.msra.mxu0 %v283
  %846 = vmatprep.subr.mxu0 0.0
  %847 = vmatpush1.msra.mxu0 %v284
  %848 = vmatprep.subr.mxu0 0.0
  %849 = vmatpush1.msra.mxu0 %v285
  %850 = vmatprep.subr.mxu0 0.0
  %851 = vmatpush1.msra.mxu0 %v286
  %852 = vmatprep.subr.mxu0 0.0
  %853 = vmatpush1.msra.mxu0 %v287
  %854 = vmatprep.subr.mxu0 0.0
  %855 = vmatpush1.msra.mxu0 %v288
  %856 = vmatprep.subr.mxu0 0.0
  %857 = vmatpush1.msra.mxu0 %v289
  %858 = vmatprep.subr.mxu0 0.0
  %859 = vmatpush1.msra.mxu0 %v290
  %860 = vmatprep.subr.mxu0 0.0
  %861 = vmatpush1.msra.mxu0 %v291
  %862 = vmatprep.subr.mxu0 0.0
  %863 = vmatpush1.msra.mxu0 %v292
  %864 = vmatprep.subr.mxu0 0.0
  %865 = vmatpush1.msra.mxu0 %v293
  %866 = vmatprep.subr.mxu0 0.0
  %867 = vmatpush1.msra.mxu0 %v294
  %868 = vmatprep.mubr.f32.mxu0 %v34
  %869 = vmatmul.mubr.f32.gmra.mrb[0].mxu0 %v33
  %v870 = vpop.f32.mrb[0].mxu0
  %v871 = vadd.f32 %v786, %v870
  %v872 = vpop.f32.mrb[0].mxu0
  %873 = vmatprep.mubr.f32.mxu0 %v50
  %874 = vmatmul.mubr.f32.gmra.mrb[0].mxu0 %v49
  %v875 = vpop.f32.mrb[0].mxu0
  %v876 = vadd.f32 %v791, %v875
  %v877 = vpop.f32.mrb[0].mxu0
  %878 = vmatprep.mubr.f32.mxu0 %v66
  %879 = vmatmul.mubr.f32.gmra.mrb[0].mxu0 %v65
  %v880 = vpop.f32.mrb[0].mxu0
  %v881 = vadd.f32 %v796, %v880
  %v882 = vpop.f32.mrb[0].mxu0
  %883 = vmatprep.mubr.f32.mxu0 %v82
  %884 = vmatmul.mubr.f32.gmra.mrb[0].mxu0 %v81
  %v885 = vpop.f32.mrb[0].mxu0
  %v886 = vadd.f32 %v801, %v885
  %v887 = vpop.f32.mrb[0].mxu0
  %888 = vdwg.mxu0
  %889 = vmatprep.subr.mxu0 0.0
  %890 = vmatpush1.msra.mxu0 %v295
  %891 = vmatprep.subr.mxu0 0.0
  %892 = vmatpush1.msra.mxu0 %v296
  %893 = vmatprep.subr.mxu0 0.0
  %894 = vmatpush1.msra.mxu0 %v297
  %895 = vmatprep.subr.mxu0 0.0
  %896 = vmatpush1.msra.mxu0 %v298
  %897 = vmatprep.subr.mxu0 0.0
  %898 = vmatpush1.msra.mxu0 %v299
  %899 = vmatprep.subr.mxu0 0.0
  %900 = vmatpush1.msra.mxu0 %v300
  %901 = vmatprep.subr.mxu0 0.0
  %902 = vmatpush1.msra.mxu0 %v301
  %903 = vmatprep.subr.mxu0 0.0
  %904 = vmatpush1.msra.mxu0 %v302
  %905 = vmatprep.subr.mxu0 0.0
  %906 = vmatpush1.msra.mxu0 %v303
  %907 = vmatprep.subr.mxu0 0.0
  %908 = vmatpush1.msra.mxu0 %v304
  %909 = vmatprep.subr.mxu0 0.0
  %910 = vmatpush1.msra.mxu0 %v305
  %911 = vmatprep.subr.mxu0 0.0
  %912 = vmatpush1.msra.mxu0 %v306
  %913 = vmatprep.subr.mxu0 0.0
  %914 = vmatpush1.msra.mxu0 %v307
  %915 = vmatprep.subr.mxu0 0.0
  %916 = vmatpush1.msra.mxu0 %v308
  %917 = vmatprep.subr.mxu0 0.0
  %918 = vmatpush1.msra.mxu0 %v309
  %919 = vmatprep.subr.mxu0 0.0
  %920 = vmatpush1.msra.mxu0 %v310
  %921 = vmatprep.subr.mxu0 0.0
  %922 = vmatpush1.msra.mxu0 %v311
  %923 = vmatprep.subr.mxu0 0.0
  %924 = vmatpush1.msra.mxu0 %v312
  %925 = vmatprep.subr.mxu0 0.0
  %926 = vmatpush1.msra.mxu0 %v313
  %927 = vmatprep.subr.mxu0 0.0
  %928 = vmatpush1.msra.mxu0 %v314
  %929 = vmatprep.subr.mxu0 0.0
  %930 = vmatpush1.msra.mxu0 %v315
  %931 = vmatprep.subr.mxu0 0.0
  %932 = vmatpush1.msra.mxu0 %v316
  %933 = vmatprep.subr.mxu0 0.0
  %934 = vmatpush1.msra.mxu0 %v317
  %935 = vmatprep.subr.mxu0 0.0
  %936 = vmatpush1.msra.mxu0 %v318
  %937 = vmatprep.subr.mxu0 0.0
  %938 = vmatpush1.msra.mxu0 %v319
  %939 = vmatprep.subr.mxu0 0.0
  %940 = vmatpush1.msra.mxu0 %v320
  %941 = vmatprep.subr.mxu0 0.0
  %942 = vmatpush1.msra.mxu0 %v321
  %943 = vmatprep.subr.mxu0 0.0
  %944 = vmatpush1.msra.mxu0 %v322
  %945 = vmatprep.subr.mxu0 0.0
  %946 = vmatpush1.msra.mxu0 %v323
  %947 = vmatprep.subr.mxu0 0.0
  %948 = vmatpush1.msra.mxu0 %v324
  %949 = vmatprep.subr.mxu0 0.0
  %950 = vmatpush1.msra.mxu0 %v325
  %951 = vmatprep.subr.mxu0 0.0
  %952 = vmatpush1.msra.mxu0 %v326
  %953 = vmatprep.mubr.f32.mxu0 %v36
  %954 = vmatmul.mubr.f32.gmra.mrb[0].mxu0 %v35
  %v955 = vpop.f32.mrb[0].mxu0
  %v956 = vadd.f32 %v871, %v955
  %v957 = vpop.f32.mrb[0].mxu0
  %958 = vmatprep.mubr.f32.mxu0 %v52
  %959 = vmatmul.mubr.f32.gmra.mrb[0].mxu0 %v51
  %v960 = vpop.f32.mrb[0].mxu0
  %v961 = vadd.f32 %v876, %v960
  %v962 = vpop.f32.mrb[0].mxu0
  %963 = vmatprep.mubr.f32.mxu0 %v68
  %964 = vmatmul.mubr.f32.gmra.mrb[0].mxu0 %v67
  %v965 = vpop.f32.mrb[0].mxu0
  %v966 = vadd.f32 %v881, %v965
  %v967 = vpop.f32.mrb[0].mxu0
  %968 = vmatprep.mubr.f32.mxu0 %v84
  %969 = vmatmul.mubr.f32.gmra.mrb[0].mxu0 %v83
  %v970 = vpop.f32.mrb[0].mxu0
  %v971 = vadd.f32 %v886, %v970
  %v972 = vpop.f32.mrb[0].mxu0
  %973 = vdwg.mxu0
  %974 = vmatprep.subr.mxu0 0.0
  %975 = vmatpush1.msra.mxu0 %v327
  %976 = vmatprep.subr.mxu0 0.0
  %977 = vmatpush1.msra.mxu0 %v328
  %978 = vmatprep.subr.mxu0 0.0
  %979 = vmatpush1.msra.mxu0 %v329
  %980 = vmatprep.subr.mxu0 0.0
  %981 = vmatpush1.msra.mxu0 %v330
  %982 = vmatprep.subr.mxu0 0.0
  %983 = vmatpush1.msra.mxu0 %v331
  %984 = vmatprep.subr.mxu0 0.0
  %985 = vmatpush1.msra.mxu0 %v332
  %986 = vmatprep.subr.mxu0 0.0
  %987 = vmatpush1.msra.mxu0 %v333
  %988 = vmatprep.subr.mxu0 0.0
  %989 = vmatpush1.msra.mxu0 %v334
  %990 = vmatprep.subr.mxu0 0.0
  %991 = vmatpush1.msra.mxu0 %v335
  %992 = vmatprep.subr.mxu0 0.0
  %993 = vmatpush1.msra.mxu0 %v336
  %994 = vmatprep.subr.mxu0 0.0
  %995 = vmatpush1.msra.mxu0 %v337
  %996 = vmatprep.subr.mxu0 0.0
  %997 = vmatpush1.msra.mxu0 %v338
  %998 = vmatprep.subr.mxu0 0.0
  %999 = vmatpush1.msra.mxu0 %v339
  %1000 = vmatprep.subr.mxu0 0.0
  %1001 = vmatpush1.msra.mxu0 %v340
  %1002 = vmatprep.subr.mxu0 0.0
  %1003 = vmatpush1.msra.mxu0 %v341
  %1004 = vmatprep.subr.mxu0 0.0
  %1005 = vmatpush1.msra.mxu0 %v342
  %1006 = vmatprep.subr.mxu0 0.0
  %1007 = vmatpush1.msra.mxu0 %v343
  %1008 = vmatprep.subr.mxu0 0.0
  %1009 = vmatpush1.msra.mxu0 %v344
  %1010 = vmatprep.subr.mxu0 0.0
  %1011 = vmatpush1.msra.mxu0 %v345
  %1012 = vmatprep.subr.mxu0 0.0
  %1013 = vmatpush1.msra.mxu0 %v346
  %1014 = vmatprep.subr.mxu0 0.0
  %1015 = vmatpush1.msra.mxu0 %v347
  %1016 = vmatprep.subr.mxu0 0.0
  %1017 = vmatpush1.msra.mxu0 %v348
  %1018 = vmatprep.subr.mxu0 0.0
  %1019 = vmatpush1.msra.mxu0 %v349
  %1020 = vmatprep.subr.mxu0 0.0
  %1021 = vmatpush1.msra.mxu0 %v350
  %1022 = vmatprep.subr.mxu0 0.0
  %1023 = vmatpush1.msra.mxu0 %v351
  %1024 = vmatprep.subr.mxu0 0.0
  %1025 = vmatpush1.msra.mxu0 %v352
  %1026 = vmatprep.subr.mxu0 0.0
  %1027 = vmatpush1.msra.mxu0 %v353
  %1028 = vmatprep.subr.mxu0 0.0
  %1029 = vmatpush1.msra.mxu0 %v354
  %1030 = vmatprep.subr.mxu0 0.0
  %1031 = vmatpush1.msra.mxu0 %v355
  %1032 = vmatprep.subr.mxu0 0.0
  %1033 = vmatpush1.msra.mxu0 %v356
  %1034 = vmatprep.subr.mxu0 0.0
  %1035 = vmatpush1.msra.mxu0 %v357
  %1036 = vmatprep.subr.mxu0 0.0
  %1037 = vmatpush1.msra.mxu0 %v358
  %1038 = vmatprep.mubr.f32.mxu0 %v38
  %1039 = vmatmul.mubr.f32.gmra.mrb[0].mxu0 %v37
  %v1040 = vpop.f32.mrb[0].mxu0
  %v1041 = vadd.f32 %v956, %v1040
  %v1042 = vpop.f32.mrb[0].mxu0
  %1043 = vmatprep.mubr.f32.mxu0 %v54
  %1044 = vmatmul.mubr.f32.gmra.mrb[0].mxu0 %v53
  %v1045 = vpop.f32.mrb[0].mxu0
  %v1046 = vadd.f32 %v961, %v1045
  %v1047 = vpop.f32.mrb[0].mxu0
  %1048 = vmatprep.mubr.f32.mxu0 %v70
  %1049 = vmatmul.mubr.f32.gmra.mrb[0].mxu0 %v69
  %v1050 = vpop.f32.mrb[0].mxu0
  %v1051 = vadd.f32 %v966, %v1050
  %v1052 = vpop.f32.mrb[0].mxu0
  %1053 = vmatprep.mubr.f32.mxu0 %v86
  %1054 = vmatmul.mubr.f32.gmra.mrb[0].mxu0 %v85
  %v1055 = vpop.f32.mrb[0].mxu0
  %v1056 = vadd.f32 %v971, %v1055
  %v1057 = vpop.f32.mrb[0].mxu0
  %1058 = vdwg.mxu0
  %vm1059 = vcmask 523264
  %v1060 = vsel %vm1059, %v1041, -inf
  %1061 = vmax.xlane.f32.xlu0 %v1060
  %v1062 = vpop.xlane.xlu0 %1061
  %v1063 = vsel %vm1059, %v1046, -inf
  %1064 = vmax.xlane.f32.xlu0 %v1063
  %v1065 = vpop.xlane.xlu0 %1064
  %v1066 = vsel %vm1059, %v1051, -inf
  %1067 = vmax.xlane.f32.xlu0 %v1066
  %v1068 = vpop.xlane.xlu0 %1067
  %v1069 = vsel %vm1059, %v1056, -inf
  %1070 = vmax.xlane.f32.xlu0 %v1069
  %v1071 = vpop.xlane.xlu0 %1070
  %v1076 = vlaneseq
  %v1077 = vand.u32 %v1076, 127
  %v1078 = vlaneseq
  %v1079 = vshrl.u32 %v1078, 7
  %v1080 = vsub.s32 %v1077, %v1079
  %v1081 = vrot.slane %v1062, %v1080
  %v1082 = vlaneseq
  %v1083 = vshrl.u32 %v1082, 7
  %v1084 = vsub.s32 %v1077, %v1083
  %v1085 = vrot.slane %v1065, %v1084
  %v1086 = vlaneseq
  %v1087 = vshrl.u32 %v1086, 7
  %v1088 = vsub.s32 %v1077, %v1087
  %v1089 = vrot.slane %v1068, %v1088
  %v1090 = vlaneseq
  %v1091 = vshrl.u32 %v1090, 7
  %v1092 = vsub.s32 %v1077, %v1091
  %v1093 = vrot.slane %v1071, %v1092
  %vm1094 = vcmask 1041409
  %v1095 = vsel %vm1094, %v1085, %v1081
  %vm1096 = vcmask 1042434
  %v1097 = vsel %vm1096, %v1089, %v1095
  %vm1098 = vcmask 1043459
  %v1099 = vsel %vm1098, %v1093, %v1097
  %vm1101 = vcmask 60416
  %v1102 = vsel %vm1101, %v1099, -inf
  %1103 = vmax.xlane.f32.xlu0 %v1102
  %v1104 = vpop.xlane.xlu0 %1103
  %v1106 = vlaneseq
  %v1107 = vshrl.u32 %v1106, 7
  %v1108 = vsub.s32 0, %v1107
  %v1109 = vrot.slane %v1104, %v1108
  %v1110 = vlaneseq
  %v1111 = vshrl.u32 %v1110, 7
  %v1112 = vsub.s32 1, %v1111
  %v1113 = vrot.slane %v1104, %v1112
  %v1114 = vlaneseq
  %v1115 = vshrl.u32 %v1114, 7
  %v1116 = vsub.s32 2, %v1115
  %v1117 = vrot.slane %v1104, %v1116
  %v1118 = vlaneseq
  %v1119 = vshrl.u32 %v1118, 7
  %v1120 = vsub.s32 3, %v1119
  %v1121 = vrot.slane %v1104, %v1120
  %v1126 = vsub.f32 %v1041, %v1109
  %v1127 = vsub.f32 %v1046, %v1113
  %v1128 = vsub.f32 %v1051, %v1117
  %v1129 = vsub.f32 %v1056, %v1121
  %v1130 = vmul.f32 %v1126, 1.442695
  %v1131 = vpow.pop %v1130
  %v1132 = vmul.f32 %v1127, 1.442695
  %v1133 = vpow.pop %v1132
  %v1134 = vmul.f32 %v1128, 1.442695
  %v1135 = vpow.pop %v1134
  %v1136 = vmul.f32 %v1129, 1.442695
  %v1137 = vpow.pop %v1136
  %v1138 = vsel %vm1059, %v1131, 0.0
  %1139 = vadd.xlane.f32.xlu0 %v1138
  %v1140 = vpop.xlane.xlu0 %1139
  %v1141 = vsel %vm1059, %v1133, 0.0
  %1142 = vadd.xlane.f32.xlu0 %v1141
  %v1143 = vpop.xlane.xlu0 %1142
  %v1144 = vsel %vm1059, %v1135, 0.0
  %1145 = vadd.xlane.f32.xlu0 %v1144
  %v1146 = vpop.xlane.xlu0 %1145
  %v1147 = vsel %vm1059, %v1137, 0.0
  %1148 = vadd.xlane.f32.xlu0 %v1147
  %v1149 = vpop.xlane.xlu0 %1148
  %v1154 = vlaneseq
  %v1155 = vshrl.u32 %v1154, 7
  %v1156 = vsub.s32 %v1077, %v1155
  %v1157 = vrot.slane %v1140, %v1156
  %v1158 = vlaneseq
  %v1159 = vshrl.u32 %v1158, 7
  %v1160 = vsub.s32 %v1077, %v1159
  %v1161 = vrot.slane %v1143, %v1160
  %v1162 = vlaneseq
  %v1163 = vshrl.u32 %v1162, 7
  %v1164 = vsub.s32 %v1077, %v1163
  %v1165 = vrot.slane %v1146, %v1164
  %v1166 = vlaneseq
  %v1167 = vshrl.u32 %v1166, 7
  %v1168 = vsub.s32 %v1077, %v1167
  %v1169 = vrot.slane %v1149, %v1168
  %v1170 = vsel %vm1094, %v1161, %v1157
  %v1171 = vsel %vm1096, %v1165, %v1170
  %v1172 = vsel %vm1098, %v1169, %v1171
  %v1174 = vsel %vm1101, %v1172, 0.0
  %1175 = vadd.xlane.f32.xlu0 %v1174
  %v1176 = vpop.xlane.xlu0 %1175
  %v1177 = vmul.f32 %v1131, %v91
  %v1178 = vmul.f32 %v1133, %v92
  %v1179 = vmul.f32 %v1135, %v93
  %v1180 = vmul.f32 %v1137, %v94
  %v1181 = vsel %vm1059, %v1177, 0.0
  %1182 = vadd.xlane.f32.xlu0 %v1181
  %v1183 = vpop.xlane.xlu0 %1182
  %v1184 = vsel %vm1059, %v1178, 0.0
  %1185 = vadd.xlane.f32.xlu0 %v1184
  %v1186 = vpop.xlane.xlu0 %1185
  %v1187 = vsel %vm1059, %v1179, 0.0
  %1188 = vadd.xlane.f32.xlu0 %v1187
  %v1189 = vpop.xlane.xlu0 %1188
  %v1190 = vsel %vm1059, %v1180, 0.0
  %1191 = vadd.xlane.f32.xlu0 %v1190
  %v1192 = vpop.xlane.xlu0 %1191
  %v1197 = vlaneseq
  %v1198 = vshrl.u32 %v1197, 7
  %v1199 = vsub.s32 %v1077, %v1198
  %v1200 = vrot.slane %v1183, %v1199
  %v1201 = vlaneseq
  %v1202 = vshrl.u32 %v1201, 7
  %v1203 = vsub.s32 %v1077, %v1202
  %v1204 = vrot.slane %v1186, %v1203
  %v1205 = vlaneseq
  %v1206 = vshrl.u32 %v1205, 7
  %v1207 = vsub.s32 %v1077, %v1206
  %v1208 = vrot.slane %v1189, %v1207
  %v1209 = vlaneseq
  %v1210 = vshrl.u32 %v1209, 7
  %v1211 = vsub.s32 %v1077, %v1210
  %v1212 = vrot.slane %v1192, %v1211
  %v1213 = vsel %vm1094, %v1204, %v1200
  %v1214 = vsel %vm1096, %v1208, %v1213
  %v1215 = vsel %vm1098, %v1212, %v1214
  %v1217 = vsel %vm1101, %v1215, 0.0
  %1218 = vadd.xlane.f32.xlu0 %v1217
  %v1219 = vpop.xlane.xlu0 %1218
  %v1220 = vmul.f32 %v1131, %v95
  %v1221 = vmul.f32 %v1133, %v96
  %v1222 = vmul.f32 %v1135, %v97
  %v1223 = vmul.f32 %v1137, %v98
  %v1224 = vsel %vm1059, %v1220, 0.0
  %1225 = vadd.xlane.f32.xlu0 %v1224
  %v1226 = vpop.xlane.xlu0 %1225
  %v1227 = vsel %vm1059, %v1221, 0.0
  %1228 = vadd.xlane.f32.xlu0 %v1227
  %v1229 = vpop.xlane.xlu0 %1228
  %v1230 = vsel %vm1059, %v1222, 0.0
  %1231 = vadd.xlane.f32.xlu0 %v1230
  %v1232 = vpop.xlane.xlu0 %1231
  %v1233 = vsel %vm1059, %v1223, 0.0
  %1234 = vadd.xlane.f32.xlu0 %v1233
  %v1235 = vpop.xlane.xlu0 %1234
  %v1240 = vlaneseq
  %v1241 = vshrl.u32 %v1240, 7
  %v1242 = vsub.s32 %v1077, %v1241
  %v1243 = vrot.slane %v1226, %v1242
  %v1244 = vlaneseq
  %v1245 = vshrl.u32 %v1244, 7
  %v1246 = vsub.s32 %v1077, %v1245
  %v1247 = vrot.slane %v1229, %v1246
  %v1248 = vlaneseq
  %v1249 = vshrl.u32 %v1248, 7
  %v1250 = vsub.s32 %v1077, %v1249
  %v1251 = vrot.slane %v1232, %v1250
  %v1252 = vlaneseq
  %v1253 = vshrl.u32 %v1252, 7
  %v1254 = vsub.s32 %v1077, %v1253
  %v1255 = vrot.slane %v1235, %v1254
  %v1256 = vsel %vm1094, %v1247, %v1243
  %v1257 = vsel %vm1096, %v1251, %v1256
  %v1258 = vsel %vm1098, %v1255, %v1257
  %v1260 = vsel %vm1101, %v1258, 0.0
  %1261 = vadd.xlane.f32.xlu0 %v1260
  %v1262 = vpop.xlane.xlu0 %1261
  %v1263 = vmul.f32 %v1131, %v99
  %v1264 = vmul.f32 %v1133, %v100
  %v1265 = vmul.f32 %v1135, %v101
  %v1266 = vmul.f32 %v1137, %v102
  %v1267 = vsel %vm1059, %v1263, 0.0
  %1268 = vadd.xlane.f32.xlu0 %v1267
  %v1269 = vpop.xlane.xlu0 %1268
  %v1270 = vsel %vm1059, %v1264, 0.0
  %1271 = vadd.xlane.f32.xlu0 %v1270
  %v1272 = vpop.xlane.xlu0 %1271
  %v1273 = vsel %vm1059, %v1265, 0.0
  %1274 = vadd.xlane.f32.xlu0 %v1273
  %v1275 = vpop.xlane.xlu0 %1274
  %v1276 = vsel %vm1059, %v1266, 0.0
  %1277 = vadd.xlane.f32.xlu0 %v1276
  %v1278 = vpop.xlane.xlu0 %1277
  %v1283 = vlaneseq
  %v1284 = vshrl.u32 %v1283, 7
  %v1285 = vsub.s32 %v1077, %v1284
  %v1286 = vrot.slane %v1269, %v1285
  %v1287 = vlaneseq
  %v1288 = vshrl.u32 %v1287, 7
  %v1289 = vsub.s32 %v1077, %v1288
  %v1290 = vrot.slane %v1272, %v1289
  %v1291 = vlaneseq
  %v1292 = vshrl.u32 %v1291, 7
  %v1293 = vsub.s32 %v1077, %v1292
  %v1294 = vrot.slane %v1275, %v1293
  %v1295 = vlaneseq
  %v1296 = vshrl.u32 %v1295, 7
  %v1297 = vsub.s32 %v1077, %v1296
  %v1298 = vrot.slane %v1278, %v1297
  %v1299 = vsel %vm1094, %v1290, %v1286
  %v1300 = vsel %vm1096, %v1294, %v1299
  %v1301 = vsel %vm1098, %v1298, %v1300
  %v1303 = vsel %vm1101, %v1301, 0.0
  %1304 = vadd.xlane.f32.xlu0 %v1303
  %v1305 = vpop.xlane.xlu0 %1304
  %vm1306 = vcmask 7168
  %v1307 = vsel %vm1306, %v1219, %v1262
  %vm1308 = vcmask 15360
  %v1309 = vsel %vm1308, %v1307, %v1305
  %v1310 = vrcp.pop %v1176
  %v1311 = vmul.f32 %v1309, %v1310
  %vm1312 = vcmask 19456
  %1313 = vst.msk [vmem:[%s6] sm:$0xf] %vm1312, %v1311
  %s1314 = scalar_lea.vmem %s0, 2048
  %v1315 = vld [vmem:[%s1314] sm:$0xff]
  %v1316 = vld [vmem:[%s1314 + $0x8] sm:$0xff]
  %v1317 = vld [vmem:[%s1314 + $0x10] sm:$0xff]
  %v1318 = vld [vmem:[%s1314 + $0x18] sm:$0xff]
  %v1319 = vld [vmem:[%s1314 + $0x20] sm:$0xff]
  %v1320 = vld [vmem:[%s1314 + $0x28] sm:$0xff]
  %v1321 = vld [vmem:[%s1314 + $0x30] sm:$0xff]
  %v1322 = vld [vmem:[%s1314 + $0x38] sm:$0xff]
  %v1323 = vld [vmem:[%s1314 + $0x40] sm:$0xff]
  %v1324 = vld [vmem:[%s1314 + $0x48] sm:$0xff]
  %v1325 = vld [vmem:[%s1314 + $0x50] sm:$0xff]
  %v1326 = vld [vmem:[%s1314 + $0x58] sm:$0xff]
  %v1327 = vld [vmem:[%s1314 + $0x60] sm:$0xff]
  %v1328 = vld [vmem:[%s1314 + $0x68] sm:$0xff]
  %v1329 = vld [vmem:[%s1314 + $0x70] sm:$0xff]
  %v1330 = vld [vmem:[%s1314 + $0x78] sm:$0xff]
  %v1331 = vld [vmem:[%s1314 + $0x80] sm:$0xff]
  %v1332 = vld [vmem:[%s1314 + $0x88] sm:$0xff]
  %v1333 = vld [vmem:[%s1314 + $0x90] sm:$0xff]
  %v1334 = vld [vmem:[%s1314 + $0x98] sm:$0xff]
  %v1335 = vld [vmem:[%s1314 + $0xa0] sm:$0xff]
  %v1336 = vld [vmem:[%s1314 + $0xa8] sm:$0xff]
  %v1337 = vld [vmem:[%s1314 + $0xb0] sm:$0xff]
  %v1338 = vld [vmem:[%s1314 + $0xb8] sm:$0xff]
  %v1339 = vld [vmem:[%s1314 + $0xc0] sm:$0xff]
  %v1340 = vld [vmem:[%s1314 + $0xc8] sm:$0xff]
  %v1341 = vld [vmem:[%s1314 + $0xd0] sm:$0xff]
  %v1342 = vld [vmem:[%s1314 + $0xd8] sm:$0xff]
  %v1343 = vld [vmem:[%s1314 + $0xe0] sm:$0xff]
  %v1344 = vld [vmem:[%s1314 + $0xe8] sm:$0xff]
  %v1345 = vld [vmem:[%s1314 + $0xf0] sm:$0xff]
  %v1346 = vld [vmem:[%s1314 + $0xf8] sm:$0xff]
  %v1347 = vld [vmem:[%s1314 + $0x100] sm:$0xff]
  %v1348 = vld [vmem:[%s1314 + $0x108] sm:$0xff]
  %v1349 = vld [vmem:[%s1314 + $0x110] sm:$0xff]
  %v1350 = vld [vmem:[%s1314 + $0x118] sm:$0xff]
  %v1351 = vld [vmem:[%s1314 + $0x120] sm:$0xff]
  %v1352 = vld [vmem:[%s1314 + $0x128] sm:$0xff]
  %v1353 = vld [vmem:[%s1314 + $0x130] sm:$0xff]
  %v1354 = vld [vmem:[%s1314 + $0x138] sm:$0xff]
  %v1355 = vld [vmem:[%s1314 + $0x140] sm:$0xff]
  %v1356 = vld [vmem:[%s1314 + $0x148] sm:$0xff]
  %v1357 = vld [vmem:[%s1314 + $0x150] sm:$0xff]
  %v1358 = vld [vmem:[%s1314 + $0x158] sm:$0xff]
  %v1359 = vld [vmem:[%s1314 + $0x160] sm:$0xff]
  %v1360 = vld [vmem:[%s1314 + $0x168] sm:$0xff]
  %v1361 = vld [vmem:[%s1314 + $0x170] sm:$0xff]
  %v1362 = vld [vmem:[%s1314 + $0x178] sm:$0xff]
  %v1363 = vld [vmem:[%s1314 + $0x180] sm:$0xff]
  %v1364 = vld [vmem:[%s1314 + $0x188] sm:$0xff]
  %v1365 = vld [vmem:[%s1314 + $0x190] sm:$0xff]
  %v1366 = vld [vmem:[%s1314 + $0x198] sm:$0xff]
  %v1367 = vld [vmem:[%s1314 + $0x1a0] sm:$0xff]
  %v1368 = vld [vmem:[%s1314 + $0x1a8] sm:$0xff]
  %v1369 = vld [vmem:[%s1314 + $0x1b0] sm:$0xff]
  %v1370 = vld [vmem:[%s1314 + $0x1b8] sm:$0xff]
  %v1371 = vld [vmem:[%s1314 + $0x1c0] sm:$0xff]
  %v1372 = vld [vmem:[%s1314 + $0x1c8] sm:$0xff]
  %v1373 = vld [vmem:[%s1314 + $0x1d0] sm:$0xff]
  %v1374 = vld [vmem:[%s1314 + $0x1d8] sm:$0xff]
  %v1375 = vld [vmem:[%s1314 + $0x1e0] sm:$0xff]
  %v1376 = vld [vmem:[%s1314 + $0x1e8] sm:$0xff]
  %v1377 = vld [vmem:[%s1314 + $0x1f0] sm:$0xff]
  %v1378 = vld [vmem:[%s1314 + $0x1f8] sm:$0xff]
  %v1379 = vld [vmem:[%s1314 + $0x200] sm:$0xff]
  %v1380 = vld [vmem:[%s1314 + $0x208] sm:$0xff]
  %v1381 = vld [vmem:[%s1314 + $0x210] sm:$0xff]
  %v1382 = vld [vmem:[%s1314 + $0x218] sm:$0xff]
  %v1383 = vld [vmem:[%s1314 + $0x220] sm:$0xff]
  %v1384 = vld [vmem:[%s1314 + $0x228] sm:$0xff]
  %v1385 = vld [vmem:[%s1314 + $0x230] sm:$0xff]
  %v1386 = vld [vmem:[%s1314 + $0x238] sm:$0xff]
  %v1387 = vld [vmem:[%s1314 + $0x240] sm:$0xff]
  %v1388 = vld [vmem:[%s1314 + $0x248] sm:$0xff]
  %v1389 = vld [vmem:[%s1314 + $0x250] sm:$0xff]
  %v1390 = vld [vmem:[%s1314 + $0x258] sm:$0xff]
  %v1391 = vld [vmem:[%s1314 + $0x260] sm:$0xff]
  %v1392 = vld [vmem:[%s1314 + $0x268] sm:$0xff]
  %v1393 = vld [vmem:[%s1314 + $0x270] sm:$0xff]
  %v1394 = vld [vmem:[%s1314 + $0x278] sm:$0xff]
  %v1395 = vld [vmem:[%s1314 + $0x280] sm:$0xff]
  %v1396 = vld [vmem:[%s1314 + $0x288] sm:$0xff]
  %v1397 = vld [vmem:[%s1314 + $0x290] sm:$0xff]
  %v1398 = vld [vmem:[%s1314 + $0x298] sm:$0xff]
  %v1399 = vld [vmem:[%s1314 + $0x2a0] sm:$0xff]
  %v1400 = vld [vmem:[%s1314 + $0x2a8] sm:$0xff]
  %v1401 = vld [vmem:[%s1314 + $0x2b0] sm:$0xff]
  %v1402 = vld [vmem:[%s1314 + $0x2b8] sm:$0xff]
  %v1403 = vld [vmem:[%s1314 + $0x2c0] sm:$0xff]
  %v1404 = vld [vmem:[%s1314 + $0x2c8] sm:$0xff]
  %v1405 = vld [vmem:[%s1314 + $0x2d0] sm:$0xff]
  %v1406 = vld [vmem:[%s1314 + $0x2d8] sm:$0xff]
  %v1407 = vld [vmem:[%s1314 + $0x2e0] sm:$0xff]
  %v1408 = vld [vmem:[%s1314 + $0x2e8] sm:$0xff]
  %v1409 = vld [vmem:[%s1314 + $0x2f0] sm:$0xff]
  %v1410 = vld [vmem:[%s1314 + $0x2f8] sm:$0xff]
  %v1411 = vld [vmem:[%s1314 + $0x300] sm:$0xff]
  %v1412 = vld [vmem:[%s1314 + $0x308] sm:$0xff]
  %v1413 = vld [vmem:[%s1314 + $0x310] sm:$0xff]
  %v1414 = vld [vmem:[%s1314 + $0x318] sm:$0xff]
  %v1415 = vld [vmem:[%s1314 + $0x320] sm:$0xff]
  %v1416 = vld [vmem:[%s1314 + $0x328] sm:$0xff]
  %v1417 = vld [vmem:[%s1314 + $0x330] sm:$0xff]
  %v1418 = vld [vmem:[%s1314 + $0x338] sm:$0xff]
  %v1419 = vld [vmem:[%s1314 + $0x340] sm:$0xff]
  %v1420 = vld [vmem:[%s1314 + $0x348] sm:$0xff]
  %v1421 = vld [vmem:[%s1314 + $0x350] sm:$0xff]
  %v1422 = vld [vmem:[%s1314 + $0x358] sm:$0xff]
  %v1423 = vld [vmem:[%s1314 + $0x360] sm:$0xff]
  %v1424 = vld [vmem:[%s1314 + $0x368] sm:$0xff]
  %v1425 = vld [vmem:[%s1314 + $0x370] sm:$0xff]
  %v1426 = vld [vmem:[%s1314 + $0x378] sm:$0xff]
  %v1427 = vld [vmem:[%s1314 + $0x380] sm:$0xff]
  %v1428 = vld [vmem:[%s1314 + $0x388] sm:$0xff]
  %v1429 = vld [vmem:[%s1314 + $0x390] sm:$0xff]
  %v1430 = vld [vmem:[%s1314 + $0x398] sm:$0xff]
  %v1431 = vld [vmem:[%s1314 + $0x3a0] sm:$0xff]
  %v1432 = vld [vmem:[%s1314 + $0x3a8] sm:$0xff]
  %v1433 = vld [vmem:[%s1314 + $0x3b0] sm:$0xff]
  %v1434 = vld [vmem:[%s1314 + $0x3b8] sm:$0xff]
  %v1435 = vld [vmem:[%s1314 + $0x3c0] sm:$0xff]
  %v1436 = vld [vmem:[%s1314 + $0x3c8] sm:$0xff]
  %v1437 = vld [vmem:[%s1314 + $0x3d0] sm:$0xff]
  %v1438 = vld [vmem:[%s1314 + $0x3d8] sm:$0xff]
  %v1439 = vld [vmem:[%s1314 + $0x3e0] sm:$0xff]
  %v1440 = vld [vmem:[%s1314 + $0x3e8] sm:$0xff]
  %v1441 = vld [vmem:[%s1314 + $0x3f0] sm:$0xff]
  %v1442 = vld [vmem:[%s1314 + $0x3f8] sm:$0xff]
  %v1443 = vld [vmem:[%s1314 + $0x400] sm:$0xff]
  %v1444 = vld [vmem:[%s1314 + $0x408] sm:$0xff]
  %v1445 = vld [vmem:[%s1314 + $0x410] sm:$0xff]
  %v1446 = vld [vmem:[%s1314 + $0x418] sm:$0xff]
  %v1447 = vld [vmem:[%s1314 + $0x420] sm:$0xff]
  %v1448 = vld [vmem:[%s1314 + $0x428] sm:$0xff]
  %v1449 = vld [vmem:[%s1314 + $0x430] sm:$0xff]
  %v1450 = vld [vmem:[%s1314 + $0x438] sm:$0xff]
  %v1451 = vld [vmem:[%s1314 + $0x440] sm:$0xff]
  %v1452 = vld [vmem:[%s1314 + $0x448] sm:$0xff]
  %v1453 = vld [vmem:[%s1314 + $0x450] sm:$0xff]
  %v1454 = vld [vmem:[%s1314 + $0x458] sm:$0xff]
  %v1455 = vld [vmem:[%s1314 + $0x460] sm:$0xff]
  %v1456 = vld [vmem:[%s1314 + $0x468] sm:$0xff]
  %v1457 = vld [vmem:[%s1314 + $0x470] sm:$0xff]
  %v1458 = vld [vmem:[%s1314 + $0x478] sm:$0xff]
  %v1459 = vld [vmem:[%s1314 + $0x480] sm:$0xff]
  %v1460 = vld [vmem:[%s1314 + $0x488] sm:$0xff]
  %v1461 = vld [vmem:[%s1314 + $0x490] sm:$0xff]
  %v1462 = vld [vmem:[%s1314 + $0x498] sm:$0xff]
  %v1463 = vld [vmem:[%s1314 + $0x4a0] sm:$0xff]
  %v1464 = vld [vmem:[%s1314 + $0x4a8] sm:$0xff]
  %v1465 = vld [vmem:[%s1314 + $0x4b0] sm:$0xff]
  %v1466 = vld [vmem:[%s1314 + $0x4b8] sm:$0xff]
  %v1467 = vld [vmem:[%s1314 + $0x4c0] sm:$0xff]
  %v1468 = vld [vmem:[%s1314 + $0x4c8] sm:$0xff]
  %v1469 = vld [vmem:[%s1314 + $0x4d0] sm:$0xff]
  %v1470 = vld [vmem:[%s1314 + $0x4d8] sm:$0xff]
  %v1471 = vld [vmem:[%s1314 + $0x4e0] sm:$0xff]
  %v1472 = vld [vmem:[%s1314 + $0x4e8] sm:$0xff]
  %v1473 = vld [vmem:[%s1314 + $0x4f0] sm:$0xff]
  %v1474 = vld [vmem:[%s1314 + $0x4f8] sm:$0xff]
  %v1475 = vld [vmem:[%s1314 + $0x500] sm:$0xff]
  %v1476 = vld [vmem:[%s1314 + $0x508] sm:$0xff]
  %v1477 = vld [vmem:[%s1314 + $0x510] sm:$0xff]
  %v1478 = vld [vmem:[%s1314 + $0x518] sm:$0xff]
  %v1479 = vld [vmem:[%s1314 + $0x520] sm:$0xff]
  %v1480 = vld [vmem:[%s1314 + $0x528] sm:$0xff]
  %v1481 = vld [vmem:[%s1314 + $0x530] sm:$0xff]
  %v1482 = vld [vmem:[%s1314 + $0x538] sm:$0xff]
  %v1483 = vld [vmem:[%s1314 + $0x540] sm:$0xff]
  %v1484 = vld [vmem:[%s1314 + $0x548] sm:$0xff]
  %v1485 = vld [vmem:[%s1314 + $0x550] sm:$0xff]
  %v1486 = vld [vmem:[%s1314 + $0x558] sm:$0xff]
  %v1487 = vld [vmem:[%s1314 + $0x560] sm:$0xff]
  %v1488 = vld [vmem:[%s1314 + $0x568] sm:$0xff]
  %v1489 = vld [vmem:[%s1314 + $0x570] sm:$0xff]
  %v1490 = vld [vmem:[%s1314 + $0x578] sm:$0xff]
  %v1491 = vld [vmem:[%s1314 + $0x580] sm:$0xff]
  %v1492 = vld [vmem:[%s1314 + $0x588] sm:$0xff]
  %v1493 = vld [vmem:[%s1314 + $0x590] sm:$0xff]
  %v1494 = vld [vmem:[%s1314 + $0x598] sm:$0xff]
  %v1495 = vld [vmem:[%s1314 + $0x5a0] sm:$0xff]
  %v1496 = vld [vmem:[%s1314 + $0x5a8] sm:$0xff]
  %v1497 = vld [vmem:[%s1314 + $0x5b0] sm:$0xff]
  %v1498 = vld [vmem:[%s1314 + $0x5b8] sm:$0xff]
  %v1499 = vld [vmem:[%s1314 + $0x5c0] sm:$0xff]
  %v1500 = vld [vmem:[%s1314 + $0x5c8] sm:$0xff]
  %v1501 = vld [vmem:[%s1314 + $0x5d0] sm:$0xff]
  %v1502 = vld [vmem:[%s1314 + $0x5d8] sm:$0xff]
  %v1503 = vld [vmem:[%s1314 + $0x5e0] sm:$0xff]
  %v1504 = vld [vmem:[%s1314 + $0x5e8] sm:$0xff]
  %v1505 = vld [vmem:[%s1314 + $0x5f0] sm:$0xff]
  %v1506 = vld [vmem:[%s1314 + $0x5f8] sm:$0xff]
  %v1507 = vld [vmem:[%s1314 + $0x600] sm:$0xff]
  %v1508 = vld [vmem:[%s1314 + $0x608] sm:$0xff]
  %v1509 = vld [vmem:[%s1314 + $0x610] sm:$0xff]
  %v1510 = vld [vmem:[%s1314 + $0x618] sm:$0xff]
  %v1511 = vld [vmem:[%s1314 + $0x620] sm:$0xff]
  %v1512 = vld [vmem:[%s1314 + $0x628] sm:$0xff]
  %v1513 = vld [vmem:[%s1314 + $0x630] sm:$0xff]
  %v1514 = vld [vmem:[%s1314 + $0x638] sm:$0xff]
  %v1515 = vld [vmem:[%s1314 + $0x640] sm:$0xff]
  %v1516 = vld [vmem:[%s1314 + $0x648] sm:$0xff]
  %v1517 = vld [vmem:[%s1314 + $0x650] sm:$0xff]
  %v1518 = vld [vmem:[%s1314 + $0x658] sm:$0xff]
  %v1519 = vld [vmem:[%s1314 + $0x660] sm:$0xff]
  %v1520 = vld [vmem:[%s1314 + $0x668] sm:$0xff]
  %v1521 = vld [vmem:[%s1314 + $0x670] sm:$0xff]
  %v1522 = vld [vmem:[%s1314 + $0x678] sm:$0xff]
  %v1523 = vld [vmem:[%s1314 + $0x680] sm:$0xff]
  %v1524 = vld [vmem:[%s1314 + $0x688] sm:$0xff]
  %v1525 = vld [vmem:[%s1314 + $0x690] sm:$0xff]
  %v1526 = vld [vmem:[%s1314 + $0x698] sm:$0xff]
  %v1527 = vld [vmem:[%s1314 + $0x6a0] sm:$0xff]
  %v1528 = vld [vmem:[%s1314 + $0x6a8] sm:$0xff]
  %v1529 = vld [vmem:[%s1314 + $0x6b0] sm:$0xff]
  %v1530 = vld [vmem:[%s1314 + $0x6b8] sm:$0xff]
  %v1531 = vld [vmem:[%s1314 + $0x6c0] sm:$0xff]
  %v1532 = vld [vmem:[%s1314 + $0x6c8] sm:$0xff]
  %v1533 = vld [vmem:[%s1314 + $0x6d0] sm:$0xff]
  %v1534 = vld [vmem:[%s1314 + $0x6d8] sm:$0xff]
  %v1535 = vld [vmem:[%s1314 + $0x6e0] sm:$0xff]
  %v1536 = vld [vmem:[%s1314 + $0x6e8] sm:$0xff]
  %v1537 = vld [vmem:[%s1314 + $0x6f0] sm:$0xff]
  %v1538 = vld [vmem:[%s1314 + $0x6f8] sm:$0xff]
  %v1539 = vld [vmem:[%s1314 + $0x700] sm:$0xff]
  %v1540 = vld [vmem:[%s1314 + $0x708] sm:$0xff]
  %v1541 = vld [vmem:[%s1314 + $0x710] sm:$0xff]
  %v1542 = vld [vmem:[%s1314 + $0x718] sm:$0xff]
  %v1543 = vld [vmem:[%s1314 + $0x720] sm:$0xff]
  %v1544 = vld [vmem:[%s1314 + $0x728] sm:$0xff]
  %v1545 = vld [vmem:[%s1314 + $0x730] sm:$0xff]
  %v1546 = vld [vmem:[%s1314 + $0x738] sm:$0xff]
  %v1547 = vld [vmem:[%s1314 + $0x740] sm:$0xff]
  %v1548 = vld [vmem:[%s1314 + $0x748] sm:$0xff]
  %v1549 = vld [vmem:[%s1314 + $0x750] sm:$0xff]
  %v1550 = vld [vmem:[%s1314 + $0x758] sm:$0xff]
  %v1551 = vld [vmem:[%s1314 + $0x760] sm:$0xff]
  %v1552 = vld [vmem:[%s1314 + $0x768] sm:$0xff]
  %v1553 = vld [vmem:[%s1314 + $0x770] sm:$0xff]
  %v1554 = vld [vmem:[%s1314 + $0x778] sm:$0xff]
  %v1555 = vld [vmem:[%s1314 + $0x780] sm:$0xff]
  %v1556 = vld [vmem:[%s1314 + $0x788] sm:$0xff]
  %v1557 = vld [vmem:[%s1314 + $0x790] sm:$0xff]
  %v1558 = vld [vmem:[%s1314 + $0x798] sm:$0xff]
  %v1559 = vld [vmem:[%s1314 + $0x7a0] sm:$0xff]
  %v1560 = vld [vmem:[%s1314 + $0x7a8] sm:$0xff]
  %v1561 = vld [vmem:[%s1314 + $0x7b0] sm:$0xff]
  %v1562 = vld [vmem:[%s1314 + $0x7b8] sm:$0xff]
  %v1563 = vld [vmem:[%s1314 + $0x7c0] sm:$0xff]
  %v1564 = vld [vmem:[%s1314 + $0x7c8] sm:$0xff]
  %v1565 = vld [vmem:[%s1314 + $0x7d0] sm:$0xff]
  %v1566 = vld [vmem:[%s1314 + $0x7d8] sm:$0xff]
  %v1567 = vld [vmem:[%s1314 + $0x7e0] sm:$0xff]
  %v1568 = vld [vmem:[%s1314 + $0x7e8] sm:$0xff]
  %v1569 = vld [vmem:[%s1314 + $0x7f0] sm:$0xff]
  %v1570 = vld [vmem:[%s1314 + $0x7f8] sm:$0xff]
  %1571 = vmatprep.subr.mxu0 0.0
  %1572 = vmatpush1.msra.mxu0 %v1315
  %1573 = vmatprep.subr.mxu0 0.0
  %1574 = vmatpush1.msra.mxu0 %v1316
  %1575 = vmatprep.subr.mxu0 0.0
  %1576 = vmatpush1.msra.mxu0 %v1317
  %1577 = vmatprep.subr.mxu0 0.0
  %1578 = vmatpush1.msra.mxu0 %v1318
  %1579 = vmatprep.subr.mxu0 0.0
  %1580 = vmatpush1.msra.mxu0 %v1319
  %1581 = vmatprep.subr.mxu0 0.0
  %1582 = vmatpush1.msra.mxu0 %v1320
  %1583 = vmatprep.subr.mxu0 0.0
  %1584 = vmatpush1.msra.mxu0 %v1321
  %1585 = vmatprep.subr.mxu0 0.0
  %1586 = vmatpush1.msra.mxu0 %v1322
  %1587 = vmatprep.subr.mxu0 0.0
  %1588 = vmatpush1.msra.mxu0 %v1323
  %1589 = vmatprep.subr.mxu0 0.0
  %1590 = vmatpush1.msra.mxu0 %v1324
  %1591 = vmatprep.subr.mxu0 0.0
  %1592 = vmatpush1.msra.mxu0 %v1325
  %1593 = vmatprep.subr.mxu0 0.0
  %1594 = vmatpush1.msra.mxu0 %v1326
  %1595 = vmatprep.subr.mxu0 0.0
  %1596 = vmatpush1.msra.mxu0 %v1327
  %1597 = vmatprep.subr.mxu0 0.0
  %1598 = vmatpush1.msra.mxu0 %v1328
  %1599 = vmatprep.subr.mxu0 0.0
  %1600 = vmatpush1.msra.mxu0 %v1329
  %1601 = vmatprep.subr.mxu0 0.0
  %1602 = vmatpush1.msra.mxu0 %v1330
  %1603 = vmatprep.subr.mxu0 0.0
  %1604 = vmatpush1.msra.mxu0 %v1331
  %1605 = vmatprep.subr.mxu0 0.0
  %1606 = vmatpush1.msra.mxu0 %v1332
  %1607 = vmatprep.subr.mxu0 0.0
  %1608 = vmatpush1.msra.mxu0 %v1333
  %1609 = vmatprep.subr.mxu0 0.0
  %1610 = vmatpush1.msra.mxu0 %v1334
  %1611 = vmatprep.subr.mxu0 0.0
  %1612 = vmatpush1.msra.mxu0 %v1335
  %1613 = vmatprep.subr.mxu0 0.0
  %1614 = vmatpush1.msra.mxu0 %v1336
  %1615 = vmatprep.subr.mxu0 0.0
  %1616 = vmatpush1.msra.mxu0 %v1337
  %1617 = vmatprep.subr.mxu0 0.0
  %1618 = vmatpush1.msra.mxu0 %v1338
  %1619 = vmatprep.subr.mxu0 0.0
  %1620 = vmatpush1.msra.mxu0 %v1339
  %1621 = vmatprep.subr.mxu0 0.0
  %1622 = vmatpush1.msra.mxu0 %v1340
  %1623 = vmatprep.subr.mxu0 0.0
  %1624 = vmatpush1.msra.mxu0 %v1341
  %1625 = vmatprep.subr.mxu0 0.0
  %1626 = vmatpush1.msra.mxu0 %v1342
  %1627 = vmatprep.subr.mxu0 0.0
  %1628 = vmatpush1.msra.mxu0 %v1343
  %1629 = vmatprep.subr.mxu0 0.0
  %1630 = vmatpush1.msra.mxu0 %v1344
  %1631 = vmatprep.subr.mxu0 0.0
  %1632 = vmatpush1.msra.mxu0 %v1345
  %1633 = vmatprep.subr.mxu0 0.0
  %1634 = vmatpush1.msra.mxu0 %v1346
  %1635 = vmatprep.mubr.f32.mxu0 %v24
  %1636 = vmatmul.mubr.f32.gmra.mrb[0].mxu0 %v23
  %v1637 = vpop.f32.mrb[0].mxu0
  %v1638 = vadd.f32 %v362, %v1637
  %v1639 = vpop.f32.mrb[0].mxu0
  %1640 = vmatprep.mubr.f32.mxu0 %v40
  %1641 = vmatmul.mubr.f32.gmra.mrb[0].mxu0 %v39
  %v1642 = vpop.f32.mrb[0].mxu0
  %v1643 = vadd.f32 %v367, %v1642
  %v1644 = vpop.f32.mrb[0].mxu0
  %1645 = vmatprep.mubr.f32.mxu0 %v56
  %1646 = vmatmul.mubr.f32.gmra.mrb[0].mxu0 %v55
  %v1647 = vpop.f32.mrb[0].mxu0
  %v1648 = vadd.f32 %v372, %v1647
  %v1649 = vpop.f32.mrb[0].mxu0
  %1650 = vmatprep.mubr.f32.mxu0 %v72
  %1651 = vmatmul.mubr.f32.gmra.mrb[0].mxu0 %v71
  %v1652 = vpop.f32.mrb[0].mxu0
  %v1653 = vadd.f32 %v377, %v1652
  %v1654 = vpop.f32.mrb[0].mxu0
  %1655 = vdwg.mxu0
  %1656 = vmatprep.subr.mxu0 0.0
  %1657 = vmatpush1.msra.mxu0 %v1347
  %1658 = vmatprep.subr.mxu0 0.0
  %1659 = vmatpush1.msra.mxu0 %v1348
  %1660 = vmatprep.subr.mxu0 0.0
  %1661 = vmatpush1.msra.mxu0 %v1349
  %1662 = vmatprep.subr.mxu0 0.0
  %1663 = vmatpush1.msra.mxu0 %v1350
  %1664 = vmatprep.subr.mxu0 0.0
  %1665 = vmatpush1.msra.mxu0 %v1351
  %1666 = vmatprep.subr.mxu0 0.0
  %1667 = vmatpush1.msra.mxu0 %v1352
  %1668 = vmatprep.subr.mxu0 0.0
  %1669 = vmatpush1.msra.mxu0 %v1353
  %1670 = vmatprep.subr.mxu0 0.0
  %1671 = vmatpush1.msra.mxu0 %v1354
  %1672 = vmatprep.subr.mxu0 0.0
  %1673 = vmatpush1.msra.mxu0 %v1355
  %1674 = vmatprep.subr.mxu0 0.0
  %1675 = vmatpush1.msra.mxu0 %v1356
  %1676 = vmatprep.subr.mxu0 0.0
  %1677 = vmatpush1.msra.mxu0 %v1357
  %1678 = vmatprep.subr.mxu0 0.0
  %1679 = vmatpush1.msra.mxu0 %v1358
  %1680 = vmatprep.subr.mxu0 0.0
  %1681 = vmatpush1.msra.mxu0 %v1359
  %1682 = vmatprep.subr.mxu0 0.0
  %1683 = vmatpush1.msra.mxu0 %v1360
  %1684 = vmatprep.subr.mxu0 0.0
  %1685 = vmatpush1.msra.mxu0 %v1361
  %1686 = vmatprep.subr.mxu0 0.0
  %1687 = vmatpush1.msra.mxu0 %v1362
  %1688 = vmatprep.subr.mxu0 0.0
  %1689 = vmatpush1.msra.mxu0 %v1363
  %1690 = vmatprep.subr.mxu0 0.0
  %1691 = vmatpush1.msra.mxu0 %v1364
  %1692 = vmatprep.subr.mxu0 0.0
  %1693 = vmatpush1.msra.mxu0 %v1365
  %1694 = vmatprep.subr.mxu0 0.0
  %1695 = vmatpush1.msra.mxu0 %v1366
  %1696 = vmatprep.subr.mxu0 0.0
  %1697 = vmatpush1.msra.mxu0 %v1367
  %1698 = vmatprep.subr.mxu0 0.0
  %1699 = vmatpush1.msra.mxu0 %v1368
  %1700 = vmatprep.subr.mxu0 0.0
  %1701 = vmatpush1.msra.mxu0 %v1369
  %1702 = vmatprep.subr.mxu0 0.0
  %1703 = vmatpush1.msra.mxu0 %v1370
  %1704 = vmatprep.subr.mxu0 0.0
  %1705 = vmatpush1.msra.mxu0 %v1371
  %1706 = vmatprep.subr.mxu0 0.0
  %1707 = vmatpush1.msra.mxu0 %v1372
  %1708 = vmatprep.subr.mxu0 0.0
  %1709 = vmatpush1.msra.mxu0 %v1373
  %1710 = vmatprep.subr.mxu0 0.0
  %1711 = vmatpush1.msra.mxu0 %v1374
  %1712 = vmatprep.subr.mxu0 0.0
  %1713 = vmatpush1.msra.mxu0 %v1375
  %1714 = vmatprep.subr.mxu0 0.0
  %1715 = vmatpush1.msra.mxu0 %v1376
  %1716 = vmatprep.subr.mxu0 0.0
  %1717 = vmatpush1.msra.mxu0 %v1377
  %1718 = vmatprep.subr.mxu0 0.0
  %1719 = vmatpush1.msra.mxu0 %v1378
  %1720 = vmatprep.mubr.f32.mxu0 %v26
  %1721 = vmatmul.mubr.f32.gmra.mrb[0].mxu0 %v25
  %v1722 = vpop.f32.mrb[0].mxu0
  %v1723 = vadd.f32 %v1638, %v1722
  %v1724 = vpop.f32.mrb[0].mxu0
  %1725 = vmatprep.mubr.f32.mxu0 %v42
  %1726 = vmatmul.mubr.f32.gmra.mrb[0].mxu0 %v41
  %v1727 = vpop.f32.mrb[0].mxu0
  %v1728 = vadd.f32 %v1643, %v1727
  %v1729 = vpop.f32.mrb[0].mxu0
  %1730 = vmatprep.mubr.f32.mxu0 %v58
  %1731 = vmatmul.mubr.f32.gmra.mrb[0].mxu0 %v57
  %v1732 = vpop.f32.mrb[0].mxu0
  %v1733 = vadd.f32 %v1648, %v1732
  %v1734 = vpop.f32.mrb[0].mxu0
  %1735 = vmatprep.mubr.f32.mxu0 %v74
  %1736 = vmatmul.mubr.f32.gmra.mrb[0].mxu0 %v73
  %v1737 = vpop.f32.mrb[0].mxu0
  %v1738 = vadd.f32 %v1653, %v1737
  %v1739 = vpop.f32.mrb[0].mxu0
  %1740 = vdwg.mxu0
  %1741 = vmatprep.subr.mxu0 0.0
  %1742 = vmatpush1.msra.mxu0 %v1379
  %1743 = vmatprep.subr.mxu0 0.0
  %1744 = vmatpush1.msra.mxu0 %v1380
  %1745 = vmatprep.subr.mxu0 0.0
  %1746 = vmatpush1.msra.mxu0 %v1381
  %1747 = vmatprep.subr.mxu0 0.0
  %1748 = vmatpush1.msra.mxu0 %v1382
  %1749 = vmatprep.subr.mxu0 0.0
  %1750 = vmatpush1.msra.mxu0 %v1383
  %1751 = vmatprep.subr.mxu0 0.0
  %1752 = vmatpush1.msra.mxu0 %v1384
  %1753 = vmatprep.subr.mxu0 0.0
  %1754 = vmatpush1.msra.mxu0 %v1385
  %1755 = vmatprep.subr.mxu0 0.0
  %1756 = vmatpush1.msra.mxu0 %v1386
  %1757 = vmatprep.subr.mxu0 0.0
  %1758 = vmatpush1.msra.mxu0 %v1387
  %1759 = vmatprep.subr.mxu0 0.0
  %1760 = vmatpush1.msra.mxu0 %v1388
  %1761 = vmatprep.subr.mxu0 0.0
  %1762 = vmatpush1.msra.mxu0 %v1389
  %1763 = vmatprep.subr.mxu0 0.0
  %1764 = vmatpush1.msra.mxu0 %v1390
  %1765 = vmatprep.subr.mxu0 0.0
  %1766 = vmatpush1.msra.mxu0 %v1391
  %1767 = vmatprep.subr.mxu0 0.0
  %1768 = vmatpush1.msra.mxu0 %v1392
  %1769 = vmatprep.subr.mxu0 0.0
  %1770 = vmatpush1.msra.mxu0 %v1393
  %1771 = vmatprep.subr.mxu0 0.0
  %1772 = vmatpush1.msra.mxu0 %v1394
  %1773 = vmatprep.subr.mxu0 0.0
  %1774 = vmatpush1.msra.mxu0 %v1395
  %1775 = vmatprep.subr.mxu0 0.0
  %1776 = vmatpush1.msra.mxu0 %v1396
  %1777 = vmatprep.subr.mxu0 0.0
  %1778 = vmatpush1.msra.mxu0 %v1397
  %1779 = vmatprep.subr.mxu0 0.0
  %1780 = vmatpush1.msra.mxu0 %v1398
  %1781 = vmatprep.subr.mxu0 0.0
  %1782 = vmatpush1.msra.mxu0 %v1399
  %1783 = vmatprep.subr.mxu0 0.0
  %1784 = vmatpush1.msra.mxu0 %v1400
  %1785 = vmatprep.subr.mxu0 0.0
  %1786 = vmatpush1.msra.mxu0 %v1401
  %1787 = vmatprep.subr.mxu0 0.0
  %1788 = vmatpush1.msra.mxu0 %v1402
  %1789 = vmatprep.subr.mxu0 0.0
  %1790 = vmatpush1.msra.mxu0 %v1403
  %1791 = vmatprep.subr.mxu0 0.0
  %1792 = vmatpush1.msra.mxu0 %v1404
  %1793 = vmatprep.subr.mxu0 0.0
  %1794 = vmatpush1.msra.mxu0 %v1405
  %1795 = vmatprep.subr.mxu0 0.0
  %1796 = vmatpush1.msra.mxu0 %v1406
  %1797 = vmatprep.subr.mxu0 0.0
  %1798 = vmatpush1.msra.mxu0 %v1407
  %1799 = vmatprep.subr.mxu0 0.0
  %1800 = vmatpush1.msra.mxu0 %v1408
  %1801 = vmatprep.subr.mxu0 0.0
  %1802 = vmatpush1.msra.mxu0 %v1409
  %1803 = vmatprep.subr.mxu0 0.0
  %1804 = vmatpush1.msra.mxu0 %v1410
  %1805 = vmatprep.mubr.f32.mxu0 %v28
  %1806 = vmatmul.mubr.f32.gmra.mrb[0].mxu0 %v27
  %v1807 = vpop.f32.mrb[0].mxu0
  %v1808 = vadd.f32 %v1723, %v1807
  %v1809 = vpop.f32.mrb[0].mxu0
  %1810 = vmatprep.mubr.f32.mxu0 %v44
  %1811 = vmatmul.mubr.f32.gmra.mrb[0].mxu0 %v43
  %v1812 = vpop.f32.mrb[0].mxu0
  %v1813 = vadd.f32 %v1728, %v1812
  %v1814 = vpop.f32.mrb[0].mxu0
  %1815 = vmatprep.mubr.f32.mxu0 %v60
  %1816 = vmatmul.mubr.f32.gmra.mrb[0].mxu0 %v59
  %v1817 = vpop.f32.mrb[0].mxu0
  %v1818 = vadd.f32 %v1733, %v1817
  %v1819 = vpop.f32.mrb[0].mxu0
  %1820 = vmatprep.mubr.f32.mxu0 %v76
  %1821 = vmatmul.mubr.f32.gmra.mrb[0].mxu0 %v75
  %v1822 = vpop.f32.mrb[0].mxu0
  %v1823 = vadd.f32 %v1738, %v1822
  %v1824 = vpop.f32.mrb[0].mxu0
  %1825 = vdwg.mxu0
  %1826 = vmatprep.subr.mxu0 0.0
  %1827 = vmatpush1.msra.mxu0 %v1411
  %1828 = vmatprep.subr.mxu0 0.0
  %1829 = vmatpush1.msra.mxu0 %v1412
  %1830 = vmatprep.subr.mxu0 0.0
  %1831 = vmatpush1.msra.mxu0 %v1413
  %1832 = vmatprep.subr.mxu0 0.0
  %1833 = vmatpush1.msra.mxu0 %v1414
  %1834 = vmatprep.subr.mxu0 0.0
  %1835 = vmatpush1.msra.mxu0 %v1415
  %1836 = vmatprep.subr.mxu0 0.0
  %1837 = vmatpush1.msra.mxu0 %v1416
  %1838 = vmatprep.subr.mxu0 0.0
  %1839 = vmatpush1.msra.mxu0 %v1417
  %1840 = vmatprep.subr.mxu0 0.0
  %1841 = vmatpush1.msra.mxu0 %v1418
  %1842 = vmatprep.subr.mxu0 0.0
  %1843 = vmatpush1.msra.mxu0 %v1419
  %1844 = vmatprep.subr.mxu0 0.0
  %1845 = vmatpush1.msra.mxu0 %v1420
  %1846 = vmatprep.subr.mxu0 0.0
  %1847 = vmatpush1.msra.mxu0 %v1421
  %1848 = vmatprep.subr.mxu0 0.0
  %1849 = vmatpush1.msra.mxu0 %v1422
  %1850 = vmatprep.subr.mxu0 0.0
  %1851 = vmatpush1.msra.mxu0 %v1423
  %1852 = vmatprep.subr.mxu0 0.0
  %1853 = vmatpush1.msra.mxu0 %v1424
  %1854 = vmatprep.subr.mxu0 0.0
  %1855 = vmatpush1.msra.mxu0 %v1425
  %1856 = vmatprep.subr.mxu0 0.0
  %1857 = vmatpush1.msra.mxu0 %v1426
  %1858 = vmatprep.subr.mxu0 0.0
  %1859 = vmatpush1.msra.mxu0 %v1427
  %1860 = vmatprep.subr.mxu0 0.0
  %1861 = vmatpush1.msra.mxu0 %v1428
  %1862 = vmatprep.subr.mxu0 0.0
  %1863 = vmatpush1.msra.mxu0 %v1429
  %1864 = vmatprep.subr.mxu0 0.0
  %1865 = vmatpush1.msra.mxu0 %v1430
  %1866 = vmatprep.subr.mxu0 0.0
  %1867 = vmatpush1.msra.mxu0 %v1431
  %1868 = vmatprep.subr.mxu0 0.0
  %1869 = vmatpush1.msra.mxu0 %v1432
  %1870 = vmatprep.subr.mxu0 0.0
  %1871 = vmatpush1.msra.mxu0 %v1433
  %1872 = vmatprep.subr.mxu0 0.0
  %1873 = vmatpush1.msra.mxu0 %v1434
  %1874 = vmatprep.subr.mxu0 0.0
  %1875 = vmatpush1.msra.mxu0 %v1435
  %1876 = vmatprep.subr.mxu0 0.0
  %1877 = vmatpush1.msra.mxu0 %v1436
  %1878 = vmatprep.subr.mxu0 0.0
  %1879 = vmatpush1.msra.mxu0 %v1437
  %1880 = vmatprep.subr.mxu0 0.0
  %1881 = vmatpush1.msra.mxu0 %v1438
  %1882 = vmatprep.subr.mxu0 0.0
  %1883 = vmatpush1.msra.mxu0 %v1439
  %1884 = vmatprep.subr.mxu0 0.0
  %1885 = vmatpush1.msra.mxu0 %v1440
  %1886 = vmatprep.subr.mxu0 0.0
  %1887 = vmatpush1.msra.mxu0 %v1441
  %1888 = vmatprep.subr.mxu0 0.0
  %1889 = vmatpush1.msra.mxu0 %v1442
  %1890 = vmatprep.mubr.f32.mxu0 %v30
  %1891 = vmatmul.mubr.f32.gmra.mrb[0].mxu0 %v29
  %v1892 = vpop.f32.mrb[0].mxu0
  %v1893 = vadd.f32 %v1808, %v1892
  %v1894 = vpop.f32.mrb[0].mxu0
  %1895 = vmatprep.mubr.f32.mxu0 %v46
  %1896 = vmatmul.mubr.f32.gmra.mrb[0].mxu0 %v45
  %v1897 = vpop.f32.mrb[0].mxu0
  %v1898 = vadd.f32 %v1813, %v1897
  %v1899 = vpop.f32.mrb[0].mxu0
  %1900 = vmatprep.mubr.f32.mxu0 %v62
  %1901 = vmatmul.mubr.f32.gmra.mrb[0].mxu0 %v61
  %v1902 = vpop.f32.mrb[0].mxu0
  %v1903 = vadd.f32 %v1818, %v1902
  %v1904 = vpop.f32.mrb[0].mxu0
  %1905 = vmatprep.mubr.f32.mxu0 %v78
  %1906 = vmatmul.mubr.f32.gmra.mrb[0].mxu0 %v77
  %v1907 = vpop.f32.mrb[0].mxu0
  %v1908 = vadd.f32 %v1823, %v1907
  %v1909 = vpop.f32.mrb[0].mxu0
  %1910 = vdwg.mxu0
  %1911 = vmatprep.subr.mxu0 0.0
  %1912 = vmatpush1.msra.mxu0 %v1443
  %1913 = vmatprep.subr.mxu0 0.0
  %1914 = vmatpush1.msra.mxu0 %v1444
  %1915 = vmatprep.subr.mxu0 0.0
  %1916 = vmatpush1.msra.mxu0 %v1445
  %1917 = vmatprep.subr.mxu0 0.0
  %1918 = vmatpush1.msra.mxu0 %v1446
  %1919 = vmatprep.subr.mxu0 0.0
  %1920 = vmatpush1.msra.mxu0 %v1447
  %1921 = vmatprep.subr.mxu0 0.0
  %1922 = vmatpush1.msra.mxu0 %v1448
  %1923 = vmatprep.subr.mxu0 0.0
  %1924 = vmatpush1.msra.mxu0 %v1449
  %1925 = vmatprep.subr.mxu0 0.0
  %1926 = vmatpush1.msra.mxu0 %v1450
  %1927 = vmatprep.subr.mxu0 0.0
  %1928 = vmatpush1.msra.mxu0 %v1451
  %1929 = vmatprep.subr.mxu0 0.0
  %1930 = vmatpush1.msra.mxu0 %v1452
  %1931 = vmatprep.subr.mxu0 0.0
  %1932 = vmatpush1.msra.mxu0 %v1453
  %1933 = vmatprep.subr.mxu0 0.0
  %1934 = vmatpush1.msra.mxu0 %v1454
  %1935 = vmatprep.subr.mxu0 0.0
  %1936 = vmatpush1.msra.mxu0 %v1455
  %1937 = vmatprep.subr.mxu0 0.0
  %1938 = vmatpush1.msra.mxu0 %v1456
  %1939 = vmatprep.subr.mxu0 0.0
  %1940 = vmatpush1.msra.mxu0 %v1457
  %1941 = vmatprep.subr.mxu0 0.0
  %1942 = vmatpush1.msra.mxu0 %v1458
  %1943 = vmatprep.subr.mxu0 0.0
  %1944 = vmatpush1.msra.mxu0 %v1459
  %1945 = vmatprep.subr.mxu0 0.0
  %1946 = vmatpush1.msra.mxu0 %v1460
  %1947 = vmatprep.subr.mxu0 0.0
  %1948 = vmatpush1.msra.mxu0 %v1461
  %1949 = vmatprep.subr.mxu0 0.0
  %1950 = vmatpush1.msra.mxu0 %v1462
  %1951 = vmatprep.subr.mxu0 0.0
  %1952 = vmatpush1.msra.mxu0 %v1463
  %1953 = vmatprep.subr.mxu0 0.0
  %1954 = vmatpush1.msra.mxu0 %v1464
  %1955 = vmatprep.subr.mxu0 0.0
  %1956 = vmatpush1.msra.mxu0 %v1465
  %1957 = vmatprep.subr.mxu0 0.0
  %1958 = vmatpush1.msra.mxu0 %v1466
  %1959 = vmatprep.subr.mxu0 0.0
  %1960 = vmatpush1.msra.mxu0 %v1467
  %1961 = vmatprep.subr.mxu0 0.0
  %1962 = vmatpush1.msra.mxu0 %v1468
  %1963 = vmatprep.subr.mxu0 0.0
  %1964 = vmatpush1.msra.mxu0 %v1469
  %1965 = vmatprep.subr.mxu0 0.0
  %1966 = vmatpush1.msra.mxu0 %v1470
  %1967 = vmatprep.subr.mxu0 0.0
  %1968 = vmatpush1.msra.mxu0 %v1471
  %1969 = vmatprep.subr.mxu0 0.0
  %1970 = vmatpush1.msra.mxu0 %v1472
  %1971 = vmatprep.subr.mxu0 0.0
  %1972 = vmatpush1.msra.mxu0 %v1473
  %1973 = vmatprep.subr.mxu0 0.0
  %1974 = vmatpush1.msra.mxu0 %v1474
  %1975 = vmatprep.mubr.f32.mxu0 %v32
  %1976 = vmatmul.mubr.f32.gmra.mrb[0].mxu0 %v31
  %v1977 = vpop.f32.mrb[0].mxu0
  %v1978 = vadd.f32 %v1893, %v1977
  %v1979 = vpop.f32.mrb[0].mxu0
  %1980 = vmatprep.mubr.f32.mxu0 %v48
  %1981 = vmatmul.mubr.f32.gmra.mrb[0].mxu0 %v47
  %v1982 = vpop.f32.mrb[0].mxu0
  %v1983 = vadd.f32 %v1898, %v1982
  %v1984 = vpop.f32.mrb[0].mxu0
  %1985 = vmatprep.mubr.f32.mxu0 %v64
  %1986 = vmatmul.mubr.f32.gmra.mrb[0].mxu0 %v63
  %v1987 = vpop.f32.mrb[0].mxu0
  %v1988 = vadd.f32 %v1903, %v1987
  %v1989 = vpop.f32.mrb[0].mxu0
  %1990 = vmatprep.mubr.f32.mxu0 %v80
  %1991 = vmatmul.mubr.f32.gmra.mrb[0].mxu0 %v79
  %v1992 = vpop.f32.mrb[0].mxu0
  %v1993 = vadd.f32 %v1908, %v1992
  %v1994 = vpop.f32.mrb[0].mxu0
  %1995 = vdwg.mxu0
  %1996 = vmatprep.subr.mxu0 0.0
  %1997 = vmatpush1.msra.mxu0 %v1475
  %1998 = vmatprep.subr.mxu0 0.0
  %1999 = vmatpush1.msra.mxu0 %v1476
  %2000 = vmatprep.subr.mxu0 0.0
  %2001 = vmatpush1.msra.mxu0 %v1477
  %2002 = vmatprep.subr.mxu0 0.0
  %2003 = vmatpush1.msra.mxu0 %v1478
  %2004 = vmatprep.subr.mxu0 0.0
  %2005 = vmatpush1.msra.mxu0 %v1479
  %2006 = vmatprep.subr.mxu0 0.0
  %2007 = vmatpush1.msra.mxu0 %v1480
  %2008 = vmatprep.subr.mxu0 0.0
  %2009 = vmatpush1.msra.mxu0 %v1481
  %2010 = vmatprep.subr.mxu0 0.0
  %2011 = vmatpush1.msra.mxu0 %v1482
  %2012 = vmatprep.subr.mxu0 0.0
  %2013 = vmatpush1.msra.mxu0 %v1483
  %2014 = vmatprep.subr.mxu0 0.0
  %2015 = vmatpush1.msra.mxu0 %v1484
  %2016 = vmatprep.subr.mxu0 0.0
  %2017 = vmatpush1.msra.mxu0 %v1485
  %2018 = vmatprep.subr.mxu0 0.0
  %2019 = vmatpush1.msra.mxu0 %v1486
  %2020 = vmatprep.subr.mxu0 0.0
  %2021 = vmatpush1.msra.mxu0 %v1487
  %2022 = vmatprep.subr.mxu0 0.0
  %2023 = vmatpush1.msra.mxu0 %v1488
  %2024 = vmatprep.subr.mxu0 0.0
  %2025 = vmatpush1.msra.mxu0 %v1489
  %2026 = vmatprep.subr.mxu0 0.0
  %2027 = vmatpush1.msra.mxu0 %v1490
  %2028 = vmatprep.subr.mxu0 0.0
  %2029 = vmatpush1.msra.mxu0 %v1491
  %2030 = vmatprep.subr.mxu0 0.0
  %2031 = vmatpush1.msra.mxu0 %v1492
  %2032 = vmatprep.subr.mxu0 0.0
  %2033 = vmatpush1.msra.mxu0 %v1493
  %2034 = vmatprep.subr.mxu0 0.0
  %2035 = vmatpush1.msra.mxu0 %v1494
  %2036 = vmatprep.subr.mxu0 0.0
  %2037 = vmatpush1.msra.mxu0 %v1495
  %2038 = vmatprep.subr.mxu0 0.0
  %2039 = vmatpush1.msra.mxu0 %v1496
  %2040 = vmatprep.subr.mxu0 0.0
  %2041 = vmatpush1.msra.mxu0 %v1497
  %2042 = vmatprep.subr.mxu0 0.0
  %2043 = vmatpush1.msra.mxu0 %v1498
  %2044 = vmatprep.subr.mxu0 0.0
  %2045 = vmatpush1.msra.mxu0 %v1499
  %2046 = vmatprep.subr.mxu0 0.0
  %2047 = vmatpush1.msra.mxu0 %v1500
  %2048 = vmatprep.subr.mxu0 0.0
  %2049 = vmatpush1.msra.mxu0 %v1501
  %2050 = vmatprep.subr.mxu0 0.0
  %2051 = vmatpush1.msra.mxu0 %v1502
  %2052 = vmatprep.subr.mxu0 0.0
  %2053 = vmatpush1.msra.mxu0 %v1503
  %2054 = vmatprep.subr.mxu0 0.0
  %2055 = vmatpush1.msra.mxu0 %v1504
  %2056 = vmatprep.subr.mxu0 0.0
  %2057 = vmatpush1.msra.mxu0 %v1505
  %2058 = vmatprep.subr.mxu0 0.0
  %2059 = vmatpush1.msra.mxu0 %v1506
  %2060 = vmatprep.mubr.f32.mxu0 %v34
  %2061 = vmatmul.mubr.f32.gmra.mrb[0].mxu0 %v33
  %v2062 = vpop.f32.mrb[0].mxu0
  %v2063 = vadd.f32 %v1978, %v2062
  %v2064 = vpop.f32.mrb[0].mxu0
  %2065 = vmatprep.mubr.f32.mxu0 %v50
  %2066 = vmatmul.mubr.f32.gmra.mrb[0].mxu0 %v49
  %v2067 = vpop.f32.mrb[0].mxu0
  %v2068 = vadd.f32 %v1983, %v2067
  %v2069 = vpop.f32.mrb[0].mxu0
  %2070 = vmatprep.mubr.f32.mxu0 %v66
  %2071 = vmatmul.mubr.f32.gmra.mrb[0].mxu0 %v65
  %v2072 = vpop.f32.mrb[0].mxu0
  %v2073 = vadd.f32 %v1988, %v2072
  %v2074 = vpop.f32.mrb[0].mxu0
  %2075 = vmatprep.mubr.f32.mxu0 %v82
  %2076 = vmatmul.mubr.f32.gmra.mrb[0].mxu0 %v81
  %v2077 = vpop.f32.mrb[0].mxu0
  %v2078 = vadd.f32 %v1993, %v2077
  %v2079 = vpop.f32.mrb[0].mxu0
  %2080 = vdwg.mxu0
  %2081 = vmatprep.subr.mxu0 0.0
  %2082 = vmatpush1.msra.mxu0 %v1507
  %2083 = vmatprep.subr.mxu0 0.0
  %2084 = vmatpush1.msra.mxu0 %v1508
  %2085 = vmatprep.subr.mxu0 0.0
  %2086 = vmatpush1.msra.mxu0 %v1509
  %2087 = vmatprep.subr.mxu0 0.0
  %2088 = vmatpush1.msra.mxu0 %v1510
  %2089 = vmatprep.subr.mxu0 0.0
  %2090 = vmatpush1.msra.mxu0 %v1511
  %2091 = vmatprep.subr.mxu0 0.0
  %2092 = vmatpush1.msra.mxu0 %v1512
  %2093 = vmatprep.subr.mxu0 0.0
  %2094 = vmatpush1.msra.mxu0 %v1513
  %2095 = vmatprep.subr.mxu0 0.0
  %2096 = vmatpush1.msra.mxu0 %v1514
  %2097 = vmatprep.subr.mxu0 0.0
  %2098 = vmatpush1.msra.mxu0 %v1515
  %2099 = vmatprep.subr.mxu0 0.0
  %2100 = vmatpush1.msra.mxu0 %v1516
  %2101 = vmatprep.subr.mxu0 0.0
  %2102 = vmatpush1.msra.mxu0 %v1517
  %2103 = vmatprep.subr.mxu0 0.0
  %2104 = vmatpush1.msra.mxu0 %v1518
  %2105 = vmatprep.subr.mxu0 0.0
  %2106 = vmatpush1.msra.mxu0 %v1519
  %2107 = vmatprep.subr.mxu0 0.0
  %2108 = vmatpush1.msra.mxu0 %v1520
  %2109 = vmatprep.subr.mxu0 0.0
  %2110 = vmatpush1.msra.mxu0 %v1521
  %2111 = vmatprep.subr.mxu0 0.0
  %2112 = vmatpush1.msra.mxu0 %v1522
  %2113 = vmatprep.subr.mxu0 0.0
  %2114 = vmatpush1.msra.mxu0 %v1523
  %2115 = vmatprep.subr.mxu0 0.0
  %2116 = vmatpush1.msra.mxu0 %v1524
  %2117 = vmatprep.subr.mxu0 0.0
  %2118 = vmatpush1.msra.mxu0 %v1525
  %2119 = vmatprep.subr.mxu0 0.0
  %2120 = vmatpush1.msra.mxu0 %v1526
  %2121 = vmatprep.subr.mxu0 0.0
  %2122 = vmatpush1.msra.mxu0 %v1527
  %2123 = vmatprep.subr.mxu0 0.0
  %2124 = vmatpush1.msra.mxu0 %v1528
  %2125 = vmatprep.subr.mxu0 0.0
  %2126 = vmatpush1.msra.mxu0 %v1529
  %2127 = vmatprep.subr.mxu0 0.0
  %2128 = vmatpush1.msra.mxu0 %v1530
  %2129 = vmatprep.subr.mxu0 0.0
  %2130 = vmatpush1.msra.mxu0 %v1531
  %2131 = vmatprep.subr.mxu0 0.0
  %2132 = vmatpush1.msra.mxu0 %v1532
  %2133 = vmatprep.subr.mxu0 0.0
  %2134 = vmatpush1.msra.mxu0 %v1533
  %2135 = vmatprep.subr.mxu0 0.0
  %2136 = vmatpush1.msra.mxu0 %v1534
  %2137 = vmatprep.subr.mxu0 0.0
  %2138 = vmatpush1.msra.mxu0 %v1535
  %2139 = vmatprep.subr.mxu0 0.0
  %2140 = vmatpush1.msra.mxu0 %v1536
  %2141 = vmatprep.subr.mxu0 0.0
  %2142 = vmatpush1.msra.mxu0 %v1537
  %2143 = vmatprep.subr.mxu0 0.0
  %2144 = vmatpush1.msra.mxu0 %v1538
  %2145 = vmatprep.mubr.f32.mxu0 %v36
  %2146 = vmatmul.mubr.f32.gmra.mrb[0].mxu0 %v35
  %v2147 = vpop.f32.mrb[0].mxu0
  %v2148 = vadd.f32 %v2063, %v2147
  %v2149 = vpop.f32.mrb[0].mxu0
  %2150 = vmatprep.mubr.f32.mxu0 %v52
  %2151 = vmatmul.mubr.f32.gmra.mrb[0].mxu0 %v51
  %v2152 = vpop.f32.mrb[0].mxu0
  %v2153 = vadd.f32 %v2068, %v2152
  %v2154 = vpop.f32.mrb[0].mxu0
  %2155 = vmatprep.mubr.f32.mxu0 %v68
  %2156 = vmatmul.mubr.f32.gmra.mrb[0].mxu0 %v67
  %v2157 = vpop.f32.mrb[0].mxu0
  %v2158 = vadd.f32 %v2073, %v2157
  %v2159 = vpop.f32.mrb[0].mxu0
  %2160 = vmatprep.mubr.f32.mxu0 %v84
  %2161 = vmatmul.mubr.f32.gmra.mrb[0].mxu0 %v83
  %v2162 = vpop.f32.mrb[0].mxu0
  %v2163 = vadd.f32 %v2078, %v2162
  %v2164 = vpop.f32.mrb[0].mxu0
  %2165 = vdwg.mxu0
  %2166 = vmatprep.subr.mxu0 0.0
  %2167 = vmatpush1.msra.mxu0 %v1539
  %2168 = vmatprep.subr.mxu0 0.0
  %2169 = vmatpush1.msra.mxu0 %v1540
  %2170 = vmatprep.subr.mxu0 0.0
  %2171 = vmatpush1.msra.mxu0 %v1541
  %2172 = vmatprep.subr.mxu0 0.0
  %2173 = vmatpush1.msra.mxu0 %v1542
  %2174 = vmatprep.subr.mxu0 0.0
  %2175 = vmatpush1.msra.mxu0 %v1543
  %2176 = vmatprep.subr.mxu0 0.0
  %2177 = vmatpush1.msra.mxu0 %v1544
  %2178 = vmatprep.subr.mxu0 0.0
  %2179 = vmatpush1.msra.mxu0 %v1545
  %2180 = vmatprep.subr.mxu0 0.0
  %2181 = vmatpush1.msra.mxu0 %v1546
  %2182 = vmatprep.subr.mxu0 0.0
  %2183 = vmatpush1.msra.mxu0 %v1547
  %2184 = vmatprep.subr.mxu0 0.0
  %2185 = vmatpush1.msra.mxu0 %v1548
  %2186 = vmatprep.subr.mxu0 0.0
  %2187 = vmatpush1.msra.mxu0 %v1549
  %2188 = vmatprep.subr.mxu0 0.0
  %2189 = vmatpush1.msra.mxu0 %v1550
  %2190 = vmatprep.subr.mxu0 0.0
  %2191 = vmatpush1.msra.mxu0 %v1551
  %2192 = vmatprep.subr.mxu0 0.0
  %2193 = vmatpush1.msra.mxu0 %v1552
  %2194 = vmatprep.subr.mxu0 0.0
  %2195 = vmatpush1.msra.mxu0 %v1553
  %2196 = vmatprep.subr.mxu0 0.0
  %2197 = vmatpush1.msra.mxu0 %v1554
  %2198 = vmatprep.subr.mxu0 0.0
  %2199 = vmatpush1.msra.mxu0 %v1555
  %2200 = vmatprep.subr.mxu0 0.0
  %2201 = vmatpush1.msra.mxu0 %v1556
  %2202 = vmatprep.subr.mxu0 0.0
  %2203 = vmatpush1.msra.mxu0 %v1557
  %2204 = vmatprep.subr.mxu0 0.0
  %2205 = vmatpush1.msra.mxu0 %v1558
  %2206 = vmatprep.subr.mxu0 0.0
  %2207 = vmatpush1.msra.mxu0 %v1559
  %2208 = vmatprep.subr.mxu0 0.0
  %2209 = vmatpush1.msra.mxu0 %v1560
  %2210 = vmatprep.subr.mxu0 0.0
  %2211 = vmatpush1.msra.mxu0 %v1561
  %2212 = vmatprep.subr.mxu0 0.0
  %2213 = vmatpush1.msra.mxu0 %v1562
  %2214 = vmatprep.subr.mxu0 0.0
  %2215 = vmatpush1.msra.mxu0 %v1563
  %2216 = vmatprep.subr.mxu0 0.0
  %2217 = vmatpush1.msra.mxu0 %v1564
  %2218 = vmatprep.subr.mxu0 0.0
  %2219 = vmatpush1.msra.mxu0 %v1565
  %2220 = vmatprep.subr.mxu0 0.0
  %2221 = vmatpush1.msra.mxu0 %v1566
  %2222 = vmatprep.subr.mxu0 0.0
  %2223 = vmatpush1.msra.mxu0 %v1567
  %2224 = vmatprep.subr.mxu0 0.0
  %2225 = vmatpush1.msra.mxu0 %v1568
  %2226 = vmatprep.subr.mxu0 0.0
  %2227 = vmatpush1.msra.mxu0 %v1569
  %2228 = vmatprep.subr.mxu0 0.0
  %2229 = vmatpush1.msra.mxu0 %v1570
  %2230 = vmatprep.mubr.f32.mxu0 %v38
  %2231 = vmatmul.mubr.f32.gmra.mrb[0].mxu0 %v37
  %v2232 = vpop.f32.mrb[0].mxu0
  %v2233 = vadd.f32 %v2148, %v2232
  %v2234 = vpop.f32.mrb[0].mxu0
  %2235 = vmatprep.mubr.f32.mxu0 %v54
  %2236 = vmatmul.mubr.f32.gmra.mrb[0].mxu0 %v53
  %v2237 = vpop.f32.mrb[0].mxu0
  %v2238 = vadd.f32 %v2153, %v2237
  %v2239 = vpop.f32.mrb[0].mxu0
  %2240 = vmatprep.mubr.f32.mxu0 %v70
  %2241 = vmatmul.mubr.f32.gmra.mrb[0].mxu0 %v69
  %v2242 = vpop.f32.mrb[0].mxu0
  %v2243 = vadd.f32 %v2158, %v2242
  %v2244 = vpop.f32.mrb[0].mxu0
  %2245 = vmatprep.mubr.f32.mxu0 %v86
  %2246 = vmatmul.mubr.f32.gmra.mrb[0].mxu0 %v85
  %v2247 = vpop.f32.mrb[0].mxu0
  %v2248 = vadd.f32 %v2163, %v2247
  %v2249 = vpop.f32.mrb[0].mxu0
  %2250 = vdwg.mxu0
  %v2251 = vsel %vm1059, %v2233, -inf
  %2252 = vmax.xlane.f32.xlu0 %v2251
  %v2253 = vpop.xlane.xlu0 %2252
  %v2254 = vsel %vm1059, %v2238, -inf
  %2255 = vmax.xlane.f32.xlu0 %v2254
  %v2256 = vpop.xlane.xlu0 %2255
  %v2257 = vsel %vm1059, %v2243, -inf
  %2258 = vmax.xlane.f32.xlu0 %v2257
  %v2259 = vpop.xlane.xlu0 %2258
  %v2260 = vsel %vm1059, %v2248, -inf
  %2261 = vmax.xlane.f32.xlu0 %v2260
  %v2262 = vpop.xlane.xlu0 %2261
  %v2267 = vlaneseq
  %v2268 = vshrl.u32 %v2267, 7
  %v2269 = vsub.s32 %v1077, %v2268
  %v2270 = vrot.slane %v2253, %v2269
  %v2271 = vlaneseq
  %v2272 = vshrl.u32 %v2271, 7
  %v2273 = vsub.s32 %v1077, %v2272
  %v2274 = vrot.slane %v2256, %v2273
  %v2275 = vlaneseq
  %v2276 = vshrl.u32 %v2275, 7
  %v2277 = vsub.s32 %v1077, %v2276
  %v2278 = vrot.slane %v2259, %v2277
  %v2279 = vlaneseq
  %v2280 = vshrl.u32 %v2279, 7
  %v2281 = vsub.s32 %v1077, %v2280
  %v2282 = vrot.slane %v2262, %v2281
  %v2283 = vsel %vm1094, %v2274, %v2270
  %v2284 = vsel %vm1096, %v2278, %v2283
  %v2285 = vsel %vm1098, %v2282, %v2284
  %v2287 = vsel %vm1101, %v2285, -inf
  %2288 = vmax.xlane.f32.xlu0 %v2287
  %v2289 = vpop.xlane.xlu0 %2288
  %v2291 = vlaneseq
  %v2292 = vshrl.u32 %v2291, 7
  %v2293 = vsub.s32 0, %v2292
  %v2294 = vrot.slane %v2289, %v2293
  %v2295 = vlaneseq
  %v2296 = vshrl.u32 %v2295, 7
  %v2297 = vsub.s32 1, %v2296
  %v2298 = vrot.slane %v2289, %v2297
  %v2299 = vlaneseq
  %v2300 = vshrl.u32 %v2299, 7
  %v2301 = vsub.s32 2, %v2300
  %v2302 = vrot.slane %v2289, %v2301
  %v2303 = vlaneseq
  %v2304 = vshrl.u32 %v2303, 7
  %v2305 = vsub.s32 3, %v2304
  %v2306 = vrot.slane %v2289, %v2305
  %v2311 = vsub.f32 %v2233, %v2294
  %v2312 = vsub.f32 %v2238, %v2298
  %v2313 = vsub.f32 %v2243, %v2302
  %v2314 = vsub.f32 %v2248, %v2306
  %v2315 = vmul.f32 %v2311, 1.442695
  %v2316 = vpow.pop %v2315
  %v2317 = vmul.f32 %v2312, 1.442695
  %v2318 = vpow.pop %v2317
  %v2319 = vmul.f32 %v2313, 1.442695
  %v2320 = vpow.pop %v2319
  %v2321 = vmul.f32 %v2314, 1.442695
  %v2322 = vpow.pop %v2321
  %v2323 = vsel %vm1059, %v2316, 0.0
  %2324 = vadd.xlane.f32.xlu0 %v2323
  %v2325 = vpop.xlane.xlu0 %2324
  %v2326 = vsel %vm1059, %v2318, 0.0
  %2327 = vadd.xlane.f32.xlu0 %v2326
  %v2328 = vpop.xlane.xlu0 %2327
  %v2329 = vsel %vm1059, %v2320, 0.0
  %2330 = vadd.xlane.f32.xlu0 %v2329
  %v2331 = vpop.xlane.xlu0 %2330
  %v2332 = vsel %vm1059, %v2322, 0.0
  %2333 = vadd.xlane.f32.xlu0 %v2332
  %v2334 = vpop.xlane.xlu0 %2333
  %v2339 = vlaneseq
  %v2340 = vshrl.u32 %v2339, 7
  %v2341 = vsub.s32 %v1077, %v2340
  %v2342 = vrot.slane %v2325, %v2341
  %v2343 = vlaneseq
  %v2344 = vshrl.u32 %v2343, 7
  %v2345 = vsub.s32 %v1077, %v2344
  %v2346 = vrot.slane %v2328, %v2345
  %v2347 = vlaneseq
  %v2348 = vshrl.u32 %v2347, 7
  %v2349 = vsub.s32 %v1077, %v2348
  %v2350 = vrot.slane %v2331, %v2349
  %v2351 = vlaneseq
  %v2352 = vshrl.u32 %v2351, 7
  %v2353 = vsub.s32 %v1077, %v2352
  %v2354 = vrot.slane %v2334, %v2353
  %v2355 = vsel %vm1094, %v2346, %v2342
  %v2356 = vsel %vm1096, %v2350, %v2355
  %v2357 = vsel %vm1098, %v2354, %v2356
  %v2359 = vsel %vm1101, %v2357, 0.0
  %2360 = vadd.xlane.f32.xlu0 %v2359
  %v2361 = vpop.xlane.xlu0 %2360
  %v2362 = vmul.f32 %v2316, %v91
  %v2363 = vmul.f32 %v2318, %v92
  %v2364 = vmul.f32 %v2320, %v93
  %v2365 = vmul.f32 %v2322, %v94
  %v2366 = vsel %vm1059, %v2362, 0.0
  %2367 = vadd.xlane.f32.xlu0 %v2366
  %v2368 = vpop.xlane.xlu0 %2367
  %v2369 = vsel %vm1059, %v2363, 0.0
  %2370 = vadd.xlane.f32.xlu0 %v2369
  %v2371 = vpop.xlane.xlu0 %2370
  %v2372 = vsel %vm1059, %v2364, 0.0
  %2373 = vadd.xlane.f32.xlu0 %v2372
  %v2374 = vpop.xlane.xlu0 %2373
  %v2375 = vsel %vm1059, %v2365, 0.0
  %2376 = vadd.xlane.f32.xlu0 %v2375
  %v2377 = vpop.xlane.xlu0 %2376
  %v2382 = vlaneseq
  %v2383 = vshrl.u32 %v2382, 7
  %v2384 = vsub.s32 %v1077, %v2383
  %v2385 = vrot.slane %v2368, %v2384
  %v2386 = vlaneseq
  %v2387 = vshrl.u32 %v2386, 7
  %v2388 = vsub.s32 %v1077, %v2387
  %v2389 = vrot.slane %v2371, %v2388
  %v2390 = vlaneseq
  %v2391 = vshrl.u32 %v2390, 7
  %v2392 = vsub.s32 %v1077, %v2391
  %v2393 = vrot.slane %v2374, %v2392
  %v2394 = vlaneseq
  %v2395 = vshrl.u32 %v2394, 7
  %v2396 = vsub.s32 %v1077, %v2395
  %v2397 = vrot.slane %v2377, %v2396
  %v2398 = vsel %vm1094, %v2389, %v2385
  %v2399 = vsel %vm1096, %v2393, %v2398
  %v2400 = vsel %vm1098, %v2397, %v2399
  %v2402 = vsel %vm1101, %v2400, 0.0
  %2403 = vadd.xlane.f32.xlu0 %v2402
  %v2404 = vpop.xlane.xlu0 %2403
  %v2405 = vmul.f32 %v2316, %v95
  %v2406 = vmul.f32 %v2318, %v96
  %v2407 = vmul.f32 %v2320, %v97
  %v2408 = vmul.f32 %v2322, %v98
  %v2409 = vsel %vm1059, %v2405, 0.0
  %2410 = vadd.xlane.f32.xlu0 %v2409
  %v2411 = vpop.xlane.xlu0 %2410
  %v2412 = vsel %vm1059, %v2406, 0.0
  %2413 = vadd.xlane.f32.xlu0 %v2412
  %v2414 = vpop.xlane.xlu0 %2413
  %v2415 = vsel %vm1059, %v2407, 0.0
  %2416 = vadd.xlane.f32.xlu0 %v2415
  %v2417 = vpop.xlane.xlu0 %2416
  %v2418 = vsel %vm1059, %v2408, 0.0
  %2419 = vadd.xlane.f32.xlu0 %v2418
  %v2420 = vpop.xlane.xlu0 %2419
  %v2425 = vlaneseq
  %v2426 = vshrl.u32 %v2425, 7
  %v2427 = vsub.s32 %v1077, %v2426
  %v2428 = vrot.slane %v2411, %v2427
  %v2429 = vlaneseq
  %v2430 = vshrl.u32 %v2429, 7
  %v2431 = vsub.s32 %v1077, %v2430
  %v2432 = vrot.slane %v2414, %v2431
  %v2433 = vlaneseq
  %v2434 = vshrl.u32 %v2433, 7
  %v2435 = vsub.s32 %v1077, %v2434
  %v2436 = vrot.slane %v2417, %v2435
  %v2437 = vlaneseq
  %v2438 = vshrl.u32 %v2437, 7
  %v2439 = vsub.s32 %v1077, %v2438
  %v2440 = vrot.slane %v2420, %v2439
  %v2441 = vsel %vm1094, %v2432, %v2428
  %v2442 = vsel %vm1096, %v2436, %v2441
  %v2443 = vsel %vm1098, %v2440, %v2442
  %v2445 = vsel %vm1101, %v2443, 0.0
  %2446 = vadd.xlane.f32.xlu0 %v2445
  %v2447 = vpop.xlane.xlu0 %2446
  %v2448 = vmul.f32 %v2316, %v99
  %v2449 = vmul.f32 %v2318, %v100
  %v2450 = vmul.f32 %v2320, %v101
  %v2451 = vmul.f32 %v2322, %v102
  %v2452 = vsel %vm1059, %v2448, 0.0
  %2453 = vadd.xlane.f32.xlu0 %v2452
  %v2454 = vpop.xlane.xlu0 %2453
  %v2455 = vsel %vm1059, %v2449, 0.0
  %2456 = vadd.xlane.f32.xlu0 %v2455
  %v2457 = vpop.xlane.xlu0 %2456
  %v2458 = vsel %vm1059, %v2450, 0.0
  %2459 = vadd.xlane.f32.xlu0 %v2458
  %v2460 = vpop.xlane.xlu0 %2459
  %v2461 = vsel %vm1059, %v2451, 0.0
  %2462 = vadd.xlane.f32.xlu0 %v2461
  %v2463 = vpop.xlane.xlu0 %2462
  %v2468 = vlaneseq
  %v2469 = vshrl.u32 %v2468, 7
  %v2470 = vsub.s32 %v1077, %v2469
  %v2471 = vrot.slane %v2454, %v2470
  %v2472 = vlaneseq
  %v2473 = vshrl.u32 %v2472, 7
  %v2474 = vsub.s32 %v1077, %v2473
  %v2475 = vrot.slane %v2457, %v2474
  %v2476 = vlaneseq
  %v2477 = vshrl.u32 %v2476, 7
  %v2478 = vsub.s32 %v1077, %v2477
  %v2479 = vrot.slane %v2460, %v2478
  %v2480 = vlaneseq
  %v2481 = vshrl.u32 %v2480, 7
  %v2482 = vsub.s32 %v1077, %v2481
  %v2483 = vrot.slane %v2463, %v2482
  %v2484 = vsel %vm1094, %v2475, %v2471
  %v2485 = vsel %vm1096, %v2479, %v2484
  %v2486 = vsel %vm1098, %v2483, %v2485
  %v2488 = vsel %vm1101, %v2486, 0.0
  %2489 = vadd.xlane.f32.xlu0 %v2488
  %v2490 = vpop.xlane.xlu0 %2489
  %v2491 = vsel %vm1306, %v2404, %v2447
  %v2492 = vsel %vm1308, %v2491, %v2490
  %v2493 = vrcp.pop %v2361
  %v2494 = vmul.f32 %v2492, %v2493
  %s2495 = scalar_lea.vmem %s6, 4
  %2496 = vst.msk [vmem:[%s2495] sm:$0xf] %vm1312, %v2494
  // Predicated region
  $region26: #{metric_scale_forward.1} parent=0 // pred_check
    _
  $region27: #{metric_scale_forward.1} parent=0 // pred_check_branch
    %2498 = sbr.rel (0) target = $region29
  $region28: #{metric_scale_forward.1} parent=0 // pred_region
    _
  $region29: #{metric_scale_forward.1} parent=0 // pred_fallthru
    _
  // Predicated region
  $region30: #{metric_scale_forward.1} parent=0 // pred_check
    _
  $region31: #{metric_scale_forward.1} parent=0 // pred_check_branch
    %2500 = sbr.rel (0) target = $region33
  $region32: #{metric_scale_forward.1} parent=0 // pred_region
    _
  $region33: #{metric_scale_forward.1} parent=0 // pred_fallthru
    _

</llo_original>
